<compile_context>
chip_gen: v6e
topology: v6e:2x2x1
jax: 0.10.0
libtpu: 0.0.40
codegen_flags: <defaults>
</compile_context>

<pallas_src>
import functools
import math

import jax
import jax.numpy as jnp
from jax.experimental import pallas as pl
from jax.experimental.pallas import tpu as pltpu


def _layernorm(y, gamma, beta, eps=1e-5):
    mu = jnp.mean(y, axis=-1, keepdims=True)
    diff = y - mu
    var = jnp.mean(diff * diff, axis=-1, keepdims=True)
    return diff * jax.lax.rsqrt(var + eps) * gamma + beta


def _pick_batch_tile(batch, seq_len, row_cap=1024):
    """Largest divisor of `batch` whose row block (Bt*S) stays under row_cap."""
    best = 1
    for bt in range(1, batch + 1):
        if batch % bt == 0 and bt * seq_len <= row_cap:
            best = bt
    return best


# --------------------------------------------------------------------------
# Decoder block kernel (self-attention + FFN), Bt batch elements per grid step
# --------------------------------------------------------------------------
def decoder_block_kernel(
    x_ref,        # (Bt, S, D) f32
    wqkv_ref,     # (D, 3D)    bf16  in_proj_weight^T (q columns pre-scaled)
    bqkv_ref,     # (1, 3D)    f32   in_proj_bias     (q part pre-scaled)
    wo_ref,       # (D, D)     bf16  out_proj.weight^T
    bo_ref,       # (1, D)     f32   out_proj.bias
    g1_ref,       # (1, D)     f32   norm1.weight
    beta1_ref,    # (1, D)     f32   norm1.bias
    w1_ref,       # (D, F)     bf16  linear1.weight^T
    bf1_ref,      # (1, F)     f32   linear1.bias
    w2_ref,       # (F, D)     bf16  linear2.weight^T
    bf2_ref,      # (1, D)     f32   linear2.bias
    g2_ref,       # (1, D)     f32   norm2.weight
    beta2_ref,    # (1, D)     f32   norm2.bias
    o_ref,        # (Bt, S, D) f32
    attn_scratch, # (Bt, S, D) f32 VMEM scratch (concat of per-head outputs)
    *,
    d_model,
    num_heads,
    seq_len,
    batch_tile,
):
    head_dim = d_model // num_heads
    S = seq_len
    Bt = batch_tile

    x = x_ref[...]                                   # (Bt, S, D) f32
    x2 = x.reshape(Bt * S, d_model)                  # flattened row block
    x2_bf = x2.astype(jnp.bfloat16)

    # ---- in-projection on the full (Bt*S, D) row block -------------------
    qkv2 = jnp.dot(x2_bf, wqkv_ref[...],
                   preferred_element_type=jnp.float32) + bqkv_ref[...]
    qkv = qkv2.reshape(Bt, S, 3 * d_model)           # (Bt, S, 3D)

    # ---- causal mask built in-kernel (no (S,S) DMA) -----------------------
    row_ids = jax.lax.broadcasted_iota(jnp.int32, (S, S), 0)
    col_ids = jax.lax.broadcasted_iota(jnp.int32, (S, S), 1)
    neg_mask = jnp.where(col_ids > row_ids,
                         jnp.float32(-1e30), jnp.float32(0.0))   # (S, S)

    # ---- per-head attention, batched over the Bt axis ---------------------
    for h in range(num_heads):
        lo = h * head_dim
        q_h = qkv[:, :, lo:lo + head_dim].astype(jnp.bfloat16)
        k_h = qkv[:, :, d_model + lo:d_model + lo + head_dim].astype(jnp.bfloat16)
        v_h = qkv[:, :, 2 * d_model + lo:2 * d_model + lo + head_dim].astype(jnp.bfloat16)

        s = jnp.einsum('bqd,bkd->bqk', q_h, k_h,
                       preferred_element_type=jnp.float32)        # (Bt, S, S)
        s = s + neg_mask[None, :, :]
        m = jnp.max(s, axis=-1, keepdims=True)
        p = jnp.exp(s - m)                                        # unnormalized
        denom = jnp.sum(p, axis=-1, keepdims=True)                # (Bt, S, 1)

        o_h = jnp.einsum('bqk,bkd->bqd', p.astype(jnp.bfloat16), v_h,
                         preferred_element_type=jnp.float32)      # (Bt, S, hd)
        # deferred softmax normalization (EUP reciprocal)
        o_h = o_h * pl.reciprocal(denom, approx=True)

        # write this head's output into its static lane slice of the scratch
        attn_scratch[:, :, lo:lo + head_dim] = o_h

    # ---- single K=D out-projection on the flattened row block -------------
    o2 = attn_scratch[...].reshape(Bt * S, d_model).astype(jnp.bfloat16)
    attn = jnp.dot(o2, wo_ref[...],
                   preferred_element_type=jnp.float32) + bo_ref[...]  # (Bt*S, D)

    # ---- residual + LayerNorm 1 (f32) --------------------------------------
    y = _layernorm(x2 + attn, g1_ref[...], beta1_ref[...])

    # ---- feed-forward: linear2(relu(linear1(y))) + residual + LN 2 ---------
    h1 = jnp.dot(y.astype(jnp.bfloat16), w1_ref[...],
                 preferred_element_type=jnp.float32) + bf1_ref[...]   # (Bt*S, F)
    h1 = jnp.maximum(h1, 0.0)
    ff = jnp.dot(h1.astype(jnp.bfloat16), w2_ref[...],
                 preferred_element_type=jnp.float32) + bf2_ref[...]   # (Bt*S, D)
    z = _layernorm(y + ff, g2_ref[...], beta2_ref[...])

    o_ref[...] = z.reshape(Bt, S, d_model).astype(o_ref.dtype)


def decoder_block_forward(x_bsd, layer, *, num_heads,
                          vmem_limit_bytes=40 * 1024 * 1024):
    """x_bsd: (B, S, D) f32, layer: prepared (pre-transposed bf16) weights."""
    B, S, D = x_bsd.shape
    F = layer["w1_t"].shape[1]
    Bt = _pick_batch_tile(B, S)

    full = lambda shape: pl.BlockSpec(shape, lambda b: (0,) * len(shape))
    kernel = functools.partial(decoder_block_kernel, d_model=D,
                               num_heads=num_heads, seq_len=S, batch_tile=Bt)

    return pl.pallas_call(
        kernel,
        out_shape=jax.ShapeDtypeStruct((B, S, D), jnp.float32),
        grid=(B // Bt,),
        in_specs=[
            pl.BlockSpec((Bt, S, D), lambda b: (b, 0, 0)),   # x
            full((D, 3 * D)),                                 # in_proj_weight^T (bf16)
            full((1, 3 * D)),                                 # in_proj_bias
            full((D, D)),                                     # out_proj.weight^T (bf16)
            full((1, D)),                                     # out_proj.bias
            full((1, D)),                                     # norm1.weight
            full((1, D)),                                     # norm1.bias
            full((D, F)),                                     # linear1.weight^T (bf16)
            full((1, F)),                                     # linear1.bias
            full((F, D)),                                     # linear2.weight^T (bf16)
            full((1, D)),                                     # linear2.bias
            full((1, D)),                                     # norm2.weight
            full((1, D)),                                     # norm2.bias
        ],
        out_specs=pl.BlockSpec((Bt, S, D), lambda b: (b, 0, 0)),
        scratch_shapes=[pltpu.VMEM((Bt, S, D), jnp.float32)],
        compiler_params=pltpu.CompilerParams(
            dimension_semantics=("parallel",),
            vmem_limit_bytes=vmem_limit_bytes),
    )(
        x_bsd,
        layer["wqkv_t"], layer["bqkv"],
        layer["wo_t"], layer["bo"],
        layer["g1"], layer["beta1"],
        layer["w1_t"], layer["bf1"],
        layer["w2_t"], layer["bf2"],
        layer["g2"], layer["beta2"],
    )


# --------------------------------------------------------------------------
# Final linear + log_softmax kernel
# --------------------------------------------------------------------------
def output_logsoftmax_kernel(x_ref, w_ref, b_ref, o_ref, *,
                             seq_len, batch_tile, d_model):
    x2 = x_ref[...].reshape(batch_tile * seq_len, d_model).astype(jnp.bfloat16)
    logits = jnp.dot(x2, w_ref[...],
                     preferred_element_type=jnp.float32) + b_ref[...]  # (Bt*S, V)
    m = jnp.max(logits, axis=-1, keepdims=True)
    lse = m + jnp.log(jnp.sum(jnp.exp(logits - m), axis=-1, keepdims=True))
    out = logits - lse
    o_ref[...] = out.reshape(batch_tile, seq_len, -1)


def output_logsoftmax_forward(x_bsd, w_out_t, b_out_row,
                              vmem_limit_bytes=40 * 1024 * 1024):
    """x_bsd: (B, S, D) f32 -> (B, S, V) log-probabilities."""
    B, S, D = x_bsd.shape
    V = w_out_t.shape[1]
    Bt = _pick_batch_tile(B, S)

    kernel = functools.partial(output_logsoftmax_kernel,
                               seq_len=S, batch_tile=Bt, d_model=D)
    # TODO(synk): tile the vocab dim (online logsumexp) for real vocab sizes.
    return pl.pallas_call(
        kernel,
        out_shape=jax.ShapeDtypeStruct((B, S, V), jnp.float32),
        grid=(B // Bt,),
        in_specs=[
            pl.BlockSpec((Bt, S, D), lambda b: (b, 0, 0)),
            pl.BlockSpec((D, V), lambda b: (0, 0)),
            pl.BlockSpec((1, V), lambda b: (0, 0)),
        ],
        out_specs=pl.BlockSpec((Bt, S, V), lambda b: (b, 0, 0)),
        compiler_params=pltpu.CompilerParams(
            dimension_semantics=("parallel",),
            vmem_limit_bytes=vmem_limit_bytes),
    )(x_bsd, w_out_t, b_out_row)


# --------------------------------------------------------------------------
# One-time host-side weight preparation (transpose, bf16 cast, q-scale fold)
# --------------------------------------------------------------------------
def _prepare_layer(layer, d_model, num_heads):
    head_dim = d_model // num_heads
    scale = 1.0 / math.sqrt(head_dim)
    q_scale = jnp.concatenate(
        [jnp.full((d_model,), scale, jnp.float32),
         jnp.ones((2 * d_model,), jnp.float32)])
    row = lambda v: v.reshape(1, -1)
    return {
        "wqkv_t": (layer["wqkv"].T * q_scale[None, :]).astype(jnp.bfloat16),
        "bqkv": (layer["bqkv"] * q_scale).reshape(1, -1),
        "wo_t": layer["wo"].T.astype(jnp.bfloat16),
        "bo": row(layer["bo"]),
        "g1": row(layer["g1"]), "beta1": row(layer["beta1"]),
        "w1_t": layer["w1"].T.astype(jnp.bfloat16),
        "bf1": row(layer["bf1"]),
        "w2_t": layer["w2"].T.astype(jnp.bfloat16),
        "bf2": row(layer["bf2"]),
        "g2": row(layer["g2"]), "beta2": row(layer["beta2"]),
    }


def prepare_params(params, *, num_heads):
    d_model = params["embedding"].shape[1]
    return {
        "embedding": params["embedding"],
        "pe": params["pe"],
        "layers": [_prepare_layer(l, d_model, num_heads) for l in params["layers"]],
        "w_out_t": params["w_out"].T.astype(jnp.bfloat16),   # (D, V)
        "b_out": params["b_out"].reshape(1, -1),             # (1, V)
    }


# --------------------------------------------------------------------------
# Full model forward (embedding + pos-enc in plain JAX, blocks in Pallas)
# --------------------------------------------------------------------------
def multi_layer_decoder_forward(token_ids, prepared, *, num_heads):
    """token_ids: (S, B) int32 -> (S, B, vocab) log-probabilities."""
    S, B = token_ids.shape
    # Gather directly into (B, S, D) so the whole layer stack runs without
    # per-layer layout transposes; positional encoding broadcasts over batch.
    x = prepared["embedding"][token_ids.T]                  # (B, S, D)
    x = x + prepared["pe"][:S][None, :, :]
    for layer in prepared["layers"]:
        x = decoder_block_forward(x, layer, num_heads=num_heads)
    out = output_logsoftmax_forward(x, prepared["w_out_t"], prepared["b_out"])
    return jnp.transpose(out, (1, 0, 2))                    # (S, B, V)


def positional_encoding_table(max_len, d_model):
    position = jnp.arange(max_len, dtype=jnp.float32)[:, None]
    div_term = jnp.exp(jnp.arange(0, d_model, 2, dtype=jnp.float32)
                       * (-math.log(10000.0) / d_model))
    pe = jnp.zeros((max_len, d_model), jnp.float32)
    pe = pe.at[:, 0::2].set(jnp.sin(position * div_term))
    pe = pe.at[:, 1::2].set(jnp.cos(position * div_term))
    return pe


def init_params(key, vocab_size, d_model, ff_hidden, num_layers, max_len=512):
    keys = jax.random.split(key, num_layers + 3)
    s_in = 1.0 / math.sqrt(d_model)
    s_ff = 1.0 / math.sqrt(ff_hidden)

    def layer_params(k):
        ks = jax.random.split(k, 6)
        return {
            "wqkv": jax.random.uniform(ks[0], (3 * d_model, d_model),
                                       jnp.float32, -s_in, s_in),
            "bqkv": jnp.zeros((3 * d_model,), jnp.float32),
            "wo": jax.random.uniform(ks[1], (d_model, d_model),
                                     jnp.float32, -s_in, s_in),
            "bo": jnp.zeros((d_model,), jnp.float32),
            "g1": jnp.ones((d_model,), jnp.float32),
            "beta1": jnp.zeros((d_model,), jnp.float32),
            "w1": jax.random.uniform(ks[2], (ff_hidden, d_model),
                                     jnp.float32, -s_in, s_in),
            "bf1": jax.random.uniform(ks[3], (ff_hidden,),
                                      jnp.float32, -s_in, s_in),
            "w2": jax.random.uniform(ks[4], (d_model, ff_hidden),
                                     jnp.float32, -s_ff, s_ff),
            "bf2": jax.random.uniform(ks[5], (d_model,),
                                      jnp.float32, -s_ff, s_ff),
            "g2": jnp.ones((d_model,), jnp.float32),
            "beta2": jnp.zeros((d_model,), jnp.float32),
        }

    return {
        "embedding": jax.random.normal(keys[0], (vocab_size, d_model), jnp.float32),
        "pe": positional_encoding_table(max_len, d_model),
        "layers": [layer_params(keys[1 + i]) for i in range(num_layers)],
        "w_out": jax.random.uniform(keys[num_layers + 1], (vocab_size, d_model),
                                    jnp.float32, -s_in, s_in),
        "b_out": jax.random.uniform(keys[num_layers + 2], (vocab_size,),
                                    jnp.float32, -s_in, s_in),
    }


if __name__ == "__main__":
    S, B, D, H, FF, V, L = 8, 2, 32, 4, 64, 128, 2   # seq, batch, d_model, heads, ffn, vocab, layers

    key = jax.random.PRNGKey(0)
    k_tok, k_p = jax.random.split(key)

    token_ids = jax.random.randint(k_tok, (S, B), 0, V, dtype=jnp.int32)
    params = init_params(k_p, V, D, FF, L)
    prepared = prepare_params(params, num_heads=H)   # one-time weight prep

    out = multi_layer_decoder_forward(token_ids, prepared, num_heads=H)
    out = jax.block_until_ready(out)

    assert out.shape == (S, B, V)
    assert bool(jnp.all(jnp.isfinite(out)))
    # log-softmax rows must exponentiate-and-sum to ~1
    assert bool(jnp.allclose(jnp.sum(jnp.exp(out), axis=-1), 1.0, atol=1e-3))
    print("KERNEL_OK")
</pallas_src>

<mosaic_0001>
module attributes {stable_mosaic.version = 11 : i64} {
  func.func @decoder_block_kernel(%arg0: i32, %arg1: memref<2x8x32xf32, #tpu.memory_space<vmem>>, %arg2: memref<32x96xbf16, #tpu.memory_space<vmem>>, %arg3: memref<1x96xf32, #tpu.memory_space<vmem>>, %arg4: memref<32x32xbf16, #tpu.memory_space<vmem>>, %arg5: memref<1x32xf32, #tpu.memory_space<vmem>>, %arg6: memref<1x32xf32, #tpu.memory_space<vmem>>, %arg7: memref<1x32xf32, #tpu.memory_space<vmem>>, %arg8: memref<32x64xbf16, #tpu.memory_space<vmem>>, %arg9: memref<1x64xf32, #tpu.memory_space<vmem>>, %arg10: memref<64x32xbf16, #tpu.memory_space<vmem>>, %arg11: memref<1x32xf32, #tpu.memory_space<vmem>>, %arg12: memref<1x32xf32, #tpu.memory_space<vmem>>, %arg13: memref<1x32xf32, #tpu.memory_space<vmem>>, %arg14: memref<2x8x32xf32, #tpu.memory_space<vmem>>, %arg15: memref<2x8x32xf32, #tpu.memory_space<vmem>>) attributes {dimension_semantics = [#tpu.dimension_semantics<parallel>], iteration_bounds = array<i64: 1>, scalar_prefetch = 0 : i64, scratch_operands = 1 : i64, tpu.core_type = #tpu.core_type<tc>, window_params = [{transform_indices = @transform_0, window_bounds = array<i64: 2, 8, 32>}, {pipeline_mode = #tpu.pipeline_mode<synchronous>, transform_indices = @transform_1, window_bounds = array<i64: 32, 96>}, {pipeline_mode = #tpu.pipeline_mode<synchronous>, transform_indices = @transform_2, window_bounds = array<i64: 1, 96>}, {pipeline_mode = #tpu.pipeline_mode<synchronous>, transform_indices = @transform_3, window_bounds = array<i64: 32, 32>}, {pipeline_mode = #tpu.pipeline_mode<synchronous>, transform_indices = @transform_4, window_bounds = array<i64: 1, 32>}, {pipeline_mode = #tpu.pipeline_mode<synchronous>, transform_indices = @transform_5, window_bounds = array<i64: 1, 32>}, {pipeline_mode = #tpu.pipeline_mode<synchronous>, transform_indices = @transform_6, window_bounds = array<i64: 1, 32>}, {pipeline_mode = #tpu.pipeline_mode<synchronous>, transform_indices = @transform_7, window_bounds = array<i64: 32, 64>}, {pipeline_mode = #tpu.pipeline_mode<synchronous>, transform_indices = @transform_8, window_bounds = array<i64: 1, 64>}, {pipeline_mode = #tpu.pipeline_mode<synchronous>, transform_indices = @transform_9, window_bounds = array<i64: 64, 32>}, {pipeline_mode = #tpu.pipeline_mode<synchronous>, transform_indices = @transform_10, window_bounds = array<i64: 1, 32>}, {pipeline_mode = #tpu.pipeline_mode<synchronous>, transform_indices = @transform_11, window_bounds = array<i64: 1, 32>}, {pipeline_mode = #tpu.pipeline_mode<synchronous>, transform_indices = @transform_12, window_bounds = array<i64: 1, 32>}, {transform_indices = @transform_13, window_bounds = array<i64: 2, 8, 32>}]} {
    %c0 = arith.constant 0 : index
    %c0_0 = arith.constant 0 : index
    %c0_1 = arith.constant 0 : index
    %0 = vector.load %arg1[%c0, %c0_0, %c0_1] : memref<2x8x32xf32, #tpu.memory_space<vmem>>, vector<2x8x32xf32>
    %1 = vector.shape_cast %0 : vector<2x8x32xf32> to vector<16x32xf32>
    %2 = arith.truncf %1 : vector<16x32xf32> to vector<16x32xbf16>
    %c0_2 = arith.constant 0 : index
    %c0_3 = arith.constant 0 : index
    %3 = vector.load %arg2[%c0_2, %c0_3] : memref<32x96xbf16, #tpu.memory_space<vmem>>, vector<32x96xbf16>
    %cst = arith.constant dense<0.000000e+00> : vector<16x96xf32>
    %4 = tpu.matmul %2, %3, %cst {dimension_numbers = #tpu.dot_dimension_numbers<[1], [0], [0], [1], [0, 0, 1, 1], [], []>} : vector<16x32xbf16>, vector<32x96xbf16>, vector<16x96xf32> -> vector<16x96xf32>
    %c0_4 = arith.constant 0 : index
    %c0_5 = arith.constant 0 : index
    %5 = vector.load %arg3[%c0_4, %c0_5] : memref<1x96xf32, #tpu.memory_space<vmem>>, vector<1x96xf32>
    %6 = vector.broadcast %5 : vector<1x96xf32> to vector<16x96xf32>
    %7 = arith.addf %4, %6 : vector<16x96xf32>
    %8 = vector.shape_cast %7 : vector<16x96xf32> to vector<2x8x96xf32>
    %9 = tpu.iota {dimensions = array<i32: 0>} : vector<8x8xi32>
    %10 = tpu.iota {dimensions = array<i32: 1>} : vector<8x8xi32>
    %11 = arith.cmpi sgt, %10, %9 : vector<8x8xi32>
    %cst_6 = arith.constant -1.000000e+30 : f32
    %cst_7 = arith.constant 0.000000e+00 : f32
    %12 = vector.broadcast %cst_6 : f32 to vector<8x8xf32>
    %13 = vector.broadcast %cst_7 : f32 to vector<8x8xf32>
    %14 = arith.select %11, %12, %13 : vector<8x8xi1>, vector<8x8xf32>
    %15 = vector.extract_strided_slice %8 {offsets = [0, 0, 0], sizes = [2, 8, 8], strides = [1, 1, 1]} : vector<2x8x96xf32> to vector<2x8x8xf32>
    %16 = arith.truncf %15 : vector<2x8x8xf32> to vector<2x8x8xbf16>
    %17 = vector.extract_strided_slice %8 {offsets = [0, 0, 32], sizes = [2, 8, 8], strides = [1, 1, 1]} : vector<2x8x96xf32> to vector<2x8x8xf32>
    %18 = arith.truncf %17 : vector<2x8x8xf32> to vector<2x8x8xbf16>
    %19 = vector.extract_strided_slice %8 {offsets = [0, 0, 64], sizes = [2, 8, 8], strides = [1, 1, 1]} : vector<2x8x96xf32> to vector<2x8x8xf32>
    %20 = arith.truncf %19 : vector<2x8x8xf32> to vector<2x8x8xbf16>
    "tpu.trace_start"() <{level = 10 : i32, message = "bqd,bkd->bqk"}> : () -> ()
    %cst_8 = arith.constant dense<0.000000e+00> : vector<2x8x8xf32>
    %21 = tpu.matmul %16, %18, %cst_8 {dimension_numbers = #tpu.dot_dimension_numbers<[2], [2], [1], [1], [0, 0, 0, 1, 1, 1], [0], [0]>} : vector<2x8x8xbf16>, vector<2x8x8xbf16>, vector<2x8x8xf32> -> vector<2x8x8xf32>
    "tpu.trace_stop"() : () -> ()
    %22 = vector.shape_cast %14 : vector<8x8xf32> to vector<1x8x8xf32>
    %23 = vector.broadcast %22 : vector<1x8x8xf32> to vector<2x8x8xf32>
    %24 = arith.addf %21, %23 : vector<2x8x8xf32>
    %cst_9 = arith.constant dense<0xFF800000> : vector<2x8xf32>
    %25 = vector.multi_reduction <maximumf>, %24, %cst_9 [2] : vector<2x8x8xf32> to vector<2x8xf32>
    %26 = vector.shape_cast %25 : vector<2x8xf32> to vector<2x8x1xf32>
    %27 = vector.broadcast %26 : vector<2x8x1xf32> to vector<2x8x8xf32>
    %28 = arith.subf %24, %27 : vector<2x8x8xf32>
    %29 = math.exp %28 : vector<2x8x8xf32>
    %cst_10 = arith.constant dense<0.000000e+00> : vector<2x8xf32>
    %30 = vector.multi_reduction <add>, %29, %cst_10 [2] : vector<2x8x8xf32> to vector<2x8xf32>
    %31 = vector.shape_cast %30 : vector<2x8xf32> to vector<2x8x1xf32>
    %32 = arith.truncf %29 : vector<2x8x8xf32> to vector<2x8x8xbf16>
    "tpu.trace_start"() <{level = 10 : i32, message = "bqk,bkd->bqd"}> : () -> ()
    %cst_11 = arith.constant dense<0.000000e+00> : vector<2x8x8xf32>
    %33 = tpu.matmul %32, %20, %cst_11 {dimension_numbers = #tpu.dot_dimension_numbers<[2], [1], [1], [2], [0, 0, 0, 1, 1, 2], [0], [0]>} : vector<2x8x8xbf16>, vector<2x8x8xbf16>, vector<2x8x8xf32> -> vector<2x8x8xf32>
    "tpu.trace_stop"() : () -> ()
    %34 = tpu.reciprocal %31 {approx = true} : vector<2x8x1xf32> -> vector<2x8x1xf32>
    %35 = vector.broadcast %34 : vector<2x8x1xf32> to vector<2x8x8xf32>
    %36 = arith.mulf %33, %35 : vector<2x8x8xf32>
    %c0_12 = arith.constant 0 : index
    %c0_13 = arith.constant 0 : index
    %c0_14 = arith.constant 0 : index
    %37 = vector.load %arg15[%c0_12, %c0_13, %c0_14] : memref<2x8x32xf32, #tpu.memory_space<vmem>>, vector<2x8x8xf32>
    tpu.vector_store %arg15[%c0_12, %c0_13, %c0_14], %36 {strides = array<i32>} : memref<2x8x32xf32, #tpu.memory_space<vmem>>, vector<2x8x8xf32>,
    %38 = vector.extract_strided_slice %8 {offsets = [0, 0, 8], sizes = [2, 8, 8], strides = [1, 1, 1]} : vector<2x8x96xf32> to vector<2x8x8xf32>
    %39 = arith.truncf %38 : vector<2x8x8xf32> to vector<2x8x8xbf16>
    %40 = vector.extract_strided_slice %8 {offsets = [0, 0, 40], sizes = [2, 8, 8], strides = [1, 1, 1]} : vector<2x8x96xf32> to vector<2x8x8xf32>
    %41 = arith.truncf %40 : vector<2x8x8xf32> to vector<2x8x8xbf16>
    %42 = vector.extract_strided_slice %8 {offsets = [0, 0, 72], sizes = [2, 8, 8], strides = [1, 1, 1]} : vector<2x8x96xf32> to vector<2x8x8xf32>
    %43 = arith.truncf %42 : vector<2x8x8xf32> to vector<2x8x8xbf16>
    "tpu.trace_start"() <{level = 10 : i32, message = "bqd,bkd->bqk"}> : () -> ()
    %cst_15 = arith.constant dense<0.000000e+00> : vector<2x8x8xf32>
    %44 = tpu.matmul %39, %41, %cst_15 {dimension_numbers = #tpu.dot_dimension_numbers<[2], [2], [1], [1], [0, 0, 0, 1, 1, 1], [0], [0]>} : vector<2x8x8xbf16>, vector<2x8x8xbf16>, vector<2x8x8xf32> -> vector<2x8x8xf32>
    "tpu.trace_stop"() : () -> ()
    %45 = vector.shape_cast %14 : vector<8x8xf32> to vector<1x8x8xf32>
    %46 = vector.broadcast %45 : vector<1x8x8xf32> to vector<2x8x8xf32>
    %47 = arith.addf %44, %46 : vector<2x8x8xf32>
    %cst_16 = arith.constant dense<0xFF800000> : vector<2x8xf32>
    %48 = vector.multi_reduction <maximumf>, %47, %cst_16 [2] : vector<2x8x8xf32> to vector<2x8xf32>
    %49 = vector.shape_cast %48 : vector<2x8xf32> to vector<2x8x1xf32>
    %50 = vector.broadcast %49 : vector<2x8x1xf32> to vector<2x8x8xf32>
    %51 = arith.subf %47, %50 : vector<2x8x8xf32>
    %52 = math.exp %51 : vector<2x8x8xf32>
    %cst_17 = arith.constant dense<0.000000e+00> : vector<2x8xf32>
    %53 = vector.multi_reduction <add>, %52, %cst_17 [2] : vector<2x8x8xf32> to vector<2x8xf32>
    %54 = vector.shape_cast %53 : vector<2x8xf32> to vector<2x8x1xf32>
    %55 = arith.truncf %52 : vector<2x8x8xf32> to vector<2x8x8xbf16>
    "tpu.trace_start"() <{level = 10 : i32, message = "bqk,bkd->bqd"}> : () -> ()
    %cst_18 = arith.constant dense<0.000000e+00> : vector<2x8x8xf32>
    %56 = tpu.matmul %55, %43, %cst_18 {dimension_numbers = #tpu.dot_dimension_numbers<[2], [1], [1], [2], [0, 0, 0, 1, 1, 2], [0], [0]>} : vector<2x8x8xbf16>, vector<2x8x8xbf16>, vector<2x8x8xf32> -> vector<2x8x8xf32>
    "tpu.trace_stop"() : () -> ()
    %57 = tpu.reciprocal %54 {approx = true} : vector<2x8x1xf32> -> vector<2x8x1xf32>
    %58 = vector.broadcast %57 : vector<2x8x1xf32> to vector<2x8x8xf32>
    %59 = arith.mulf %56, %58 : vector<2x8x8xf32>
    %c0_19 = arith.constant 0 : index
    %c0_20 = arith.constant 0 : index
    %c8 = arith.constant 8 : index
    %60 = vector.load %arg15[%c0_19, %c0_20, %c8] : memref<2x8x32xf32, #tpu.memory_space<vmem>>, vector<2x8x8xf32>
    tpu.vector_store %arg15[%c0_19, %c0_20, %c8], %59 {strides = array<i32>} : memref<2x8x32xf32, #tpu.memory_space<vmem>>, vector<2x8x8xf32>,
    %61 = vector.extract_strided_slice %8 {offsets = [0, 0, 16], sizes = [2, 8, 8], strides = [1, 1, 1]} : vector<2x8x96xf32> to vector<2x8x8xf32>
    %62 = arith.truncf %61 : vector<2x8x8xf32> to vector<2x8x8xbf16>
    %63 = vector.extract_strided_slice %8 {offsets = [0, 0, 48], sizes = [2, 8, 8], strides = [1, 1, 1]} : vector<2x8x96xf32> to vector<2x8x8xf32>
    %64 = arith.truncf %63 : vector<2x8x8xf32> to vector<2x8x8xbf16>
    %65 = vector.extract_strided_slice %8 {offsets = [0, 0, 80], sizes = [2, 8, 8], strides = [1, 1, 1]} : vector<2x8x96xf32> to vector<2x8x8xf32>
    %66 = arith.truncf %65 : vector<2x8x8xf32> to vector<2x8x8xbf16>
    "tpu.trace_start"() <{level = 10 : i32, message = "bqd,bkd->bqk"}> : () -> ()
    %cst_21 = arith.constant dense<0.000000e+00> : vector<2x8x8xf32>
    %67 = tpu.matmul %62, %64, %cst_21 {dimension_numbers = #tpu.dot_dimension_numbers<[2], [2], [1], [1], [0, 0, 0, 1, 1, 1], [0], [0]>} : vector<2x8x8xbf16>, vector<2x8x8xbf16>, vector<2x8x8xf32> -> vector<2x8x8xf32>
    "tpu.trace_stop"() : () -> ()
    %68 = vector.shape_cast %14 : vector<8x8xf32> to vector<1x8x8xf32>
    %69 = vector.broadcast %68 : vector<1x8x8xf32> to vector<2x8x8xf32>
    %70 = arith.addf %67, %69 : vector<2x8x8xf32>
    %cst_22 = arith.constant dense<0xFF800000> : vector<2x8xf32>
    %71 = vector.multi_reduction <maximumf>, %70, %cst_22 [2] : vector<2x8x8xf32> to vector<2x8xf32>
    %72 = vector.shape_cast %71 : vector<2x8xf32> to vector<2x8x1xf32>
    %73 = vector.broadcast %72 : vector<2x8x1xf32> to vector<2x8x8xf32>
    %74 = arith.subf %70, %73 : vector<2x8x8xf32>
    %75 = math.exp %74 : vector<2x8x8xf32>
    %cst_23 = arith.constant dense<0.000000e+00> : vector<2x8xf32>
    %76 = vector.multi_reduction <add>, %75, %cst_23 [2] : vector<2x8x8xf32> to vector<2x8xf32>
    %77 = vector.shape_cast %76 : vector<2x8xf32> to vector<2x8x1xf32>
    %78 = arith.truncf %75 : vector<2x8x8xf32> to vector<2x8x8xbf16>
    "tpu.trace_start"() <{level = 10 : i32, message = "bqk,bkd->bqd"}> : () -> ()
    %cst_24 = arith.constant dense<0.000000e+00> : vector<2x8x8xf32>
    %79 = tpu.matmul %78, %66, %cst_24 {dimension_numbers = #tpu.dot_dimension_numbers<[2], [1], [1], [2], [0, 0, 0, 1, 1, 2], [0], [0]>} : vector<2x8x8xbf16>, vector<2x8x8xbf16>, vector<2x8x8xf32> -> vector<2x8x8xf32>
    "tpu.trace_stop"() : () -> ()
    %80 = tpu.reciprocal %77 {approx = true} : vector<2x8x1xf32> -> vector<2x8x1xf32>
    %81 = vector.broadcast %80 : vector<2x8x1xf32> to vector<2x8x8xf32>
    %82 = arith.mulf %79, %81 : vector<2x8x8xf32>
    %c0_25 = arith.constant 0 : index
    %c0_26 = arith.constant 0 : index
    %c16 = arith.constant 16 : index
    %83 = vector.load %arg15[%c0_25, %c0_26, %c16] : memref<2x8x32xf32, #tpu.memory_space<vmem>>, vector<2x8x8xf32>
    tpu.vector_store %arg15[%c0_25, %c0_26, %c16], %82 {strides = array<i32>} : memref<2x8x32xf32, #tpu.memory_space<vmem>>, vector<2x8x8xf32>,
    %84 = vector.extract_strided_slice %8 {offsets = [0, 0, 24], sizes = [2, 8, 8], strides = [1, 1, 1]} : vector<2x8x96xf32> to vector<2x8x8xf32>
    %85 = arith.truncf %84 : vector<2x8x8xf32> to vector<2x8x8xbf16>
    %86 = vector.extract_strided_slice %8 {offsets = [0, 0, 56], sizes = [2, 8, 8], strides = [1, 1, 1]} : vector<2x8x96xf32> to vector<2x8x8xf32>
    %87 = arith.truncf %86 : vector<2x8x8xf32> to vector<2x8x8xbf16>
    %88 = vector.extract_strided_slice %8 {offsets = [0, 0, 88], sizes = [2, 8, 8], strides = [1, 1, 1]} : vector<2x8x96xf32> to vector<2x8x8xf32>
    %89 = arith.truncf %88 : vector<2x8x8xf32> to vector<2x8x8xbf16>
    "tpu.trace_start"() <{level = 10 : i32, message = "bqd,bkd->bqk"}> : () -> ()
    %cst_27 = arith.constant dense<0.000000e+00> : vector<2x8x8xf32>
    %90 = tpu.matmul %85, %87, %cst_27 {dimension_numbers = #tpu.dot_dimension_numbers<[2], [2], [1], [1], [0, 0, 0, 1, 1, 1], [0], [0]>} : vector<2x8x8xbf16>, vector<2x8x8xbf16>, vector<2x8x8xf32> -> vector<2x8x8xf32>
    "tpu.trace_stop"() : () -> ()
    %91 = vector.shape_cast %14 : vector<8x8xf32> to vector<1x8x8xf32>
    %92 = vector.broadcast %91 : vector<1x8x8xf32> to vector<2x8x8xf32>
    %93 = arith.addf %90, %92 : vector<2x8x8xf32>
    %cst_28 = arith.constant dense<0xFF800000> : vector<2x8xf32>
    %94 = vector.multi_reduction <maximumf>, %93, %cst_28 [2] : vector<2x8x8xf32> to vector<2x8xf32>
    %95 = vector.shape_cast %94 : vector<2x8xf32> to vector<2x8x1xf32>
    %96 = vector.broadcast %95 : vector<2x8x1xf32> to vector<2x8x8xf32>
    %97 = arith.subf %93, %96 : vector<2x8x8xf32>
    %98 = math.exp %97 : vector<2x8x8xf32>
    %cst_29 = arith.constant dense<0.000000e+00> : vector<2x8xf32>
    %99 = vector.multi_reduction <add>, %98, %cst_29 [2] : vector<2x8x8xf32> to vector<2x8xf32>
    %100 = vector.shape_cast %99 : vector<2x8xf32> to vector<2x8x1xf32>
    %101 = arith.truncf %98 : vector<2x8x8xf32> to vector<2x8x8xbf16>
    "tpu.trace_start"() <{level = 10 : i32, message = "bqk,bkd->bqd"}> : () -> ()
    %cst_30 = arith.constant dense<0.000000e+00> : vector<2x8x8xf32>
    %102 = tpu.matmul %101, %89, %cst_30 {dimension_numbers = #tpu.dot_dimension_numbers<[2], [1], [1], [2], [0, 0, 0, 1, 1, 2], [0], [0]>} : vector<2x8x8xbf16>, vector<2x8x8xbf16>, vector<2x8x8xf32> -> vector<2x8x8xf32>
    "tpu.trace_stop"() : () -> ()
    %103 = tpu.reciprocal %100 {approx = true} : vector<2x8x1xf32> -> vector<2x8x1xf32>
    %104 = vector.broadcast %103 : vector<2x8x1xf32> to vector<2x8x8xf32>
    %105 = arith.mulf %102, %104 : vector<2x8x8xf32>
    %c0_31 = arith.constant 0 : index
    %c0_32 = arith.constant 0 : index
    %c24 = arith.constant 24 : index
    %106 = vector.load %arg15[%c0_31, %c0_32, %c24] : memref<2x8x32xf32, #tpu.memory_space<vmem>>, vector<2x8x8xf32>
    tpu.vector_store %arg15[%c0_31, %c0_32, %c24], %105 {strides = array<i32>} : memref<2x8x32xf32, #tpu.memory_space<vmem>>, vector<2x8x8xf32>,
    %c0_33 = arith.constant 0 : index
    %c0_34 = arith.constant 0 : index
    %c0_35 = arith.constant 0 : index
    %107 = vector.load %arg15[%c0_33, %c0_34, %c0_35] : memref<2x8x32xf32, #tpu.memory_space<vmem>>, vector<2x8x32xf32>
    %108 = vector.shape_cast %107 : vector<2x8x32xf32> to vector<16x32xf32>
    %109 = arith.truncf %108 : vector<16x32xf32> to vector<16x32xbf16>
    %c0_36 = arith.constant 0 : index
    %c0_37 = arith.constant 0 : index
    %110 = vector.load %arg4[%c0_36, %c0_37] : memref<32x32xbf16, #tpu.memory_space<vmem>>, vector<32x32xbf16>
    %cst_38 = arith.constant dense<0.000000e+00> : vector<16x32xf32>
    %111 = tpu.matmul %109, %110, %cst_38 {dimension_numbers = #tpu.dot_dimension_numbers<[1], [0], [0], [1], [0, 0, 1, 1], [], []>} : vector<16x32xbf16>, vector<32x32xbf16>, vector<16x32xf32> -> vector<16x32xf32>
    %c0_39 = arith.constant 0 : index
    %c0_40 = arith.constant 0 : index
    %112 = vector.load %arg5[%c0_39, %c0_40] : memref<1x32xf32, #tpu.memory_space<vmem>>, vector<1x32xf32>
    %113 = vector.broadcast %112 : vector<1x32xf32> to vector<16x32xf32>
    %114 = arith.addf %111, %113 : vector<16x32xf32>
    %115 = arith.addf %1, %114 : vector<16x32xf32>
    %c0_41 = arith.constant 0 : index
    %c0_42 = arith.constant 0 : index
    %116 = vector.load %arg6[%c0_41, %c0_42] : memref<1x32xf32, #tpu.memory_space<vmem>>, vector<1x32xf32>
    %c0_43 = arith.constant 0 : index
    %c0_44 = arith.constant 0 : index
    %117 = vector.load %arg7[%c0_43, %c0_44] : memref<1x32xf32, #tpu.memory_space<vmem>>, vector<1x32xf32>
    %cst_45 = arith.constant dense<0.000000e+00> : vector<16xf32>
    %118 = vector.multi_reduction <add>, %115, %cst_45 [1] : vector<16x32xf32> to vector<16xf32>
    %119 = vector.shape_cast %118 : vector<16xf32> to vector<16x1xf32>
    %cst_46 = arith.constant 3.200000e+01 : f32
    %120 = vector.broadcast %cst_46 : f32 to vector<16x1xf32>
    %121 = arith.divf %119, %120 : vector<16x1xf32>
    %122 = vector.broadcast %121 : vector<16x1xf32> to vector<16x32xf32>
    %123 = arith.subf %115, %122 : vector<16x32xf32>
    %124 = arith.mulf %123, %123 : vector<16x32xf32>
    %cst_47 = arith.constant dense<0.000000e+00> : vector<16xf32>
    %125 = vector.multi_reduction <add>, %124, %cst_47 [1] : vector<16x32xf32> to vector<16xf32>
    %126 = vector.shape_cast %125 : vector<16xf32> to vector<16x1xf32>
    %cst_48 = arith.constant 3.200000e+01 : f32
    %127 = vector.broadcast %cst_48 : f32 to vector<16x1xf32>
    %128 = arith.divf %126, %127 : vector<16x1xf32>
    %cst_49 = arith.constant 9.99999974E-6 : f32
    %129 = vector.broadcast %cst_49 : f32 to vector<16x1xf32>
    %130 = arith.addf %128, %129 : vector<16x1xf32>
    %131 = math.rsqrt %130 : vector<16x1xf32>
    %132 = vector.broadcast %131 : vector<16x1xf32> to vector<16x32xf32>
    %133 = arith.mulf %123, %132 : vector<16x32xf32>
    %134 = vector.broadcast %116 : vector<1x32xf32> to vector<16x32xf32>
    %135 = arith.mulf %133, %134 : vector<16x32xf32>
    %136 = vector.broadcast %117 : vector<1x32xf32> to vector<16x32xf32>
    %137 = arith.addf %135, %136 : vector<16x32xf32>
    %138 = arith.truncf %137 : vector<16x32xf32> to vector<16x32xbf16>
    %c0_50 = arith.constant 0 : index
    %c0_51 = arith.constant 0 : index
    %139 = vector.load %arg8[%c0_50, %c0_51] : memref<32x64xbf16, #tpu.memory_space<vmem>>, vector<32x64xbf16>
    %cst_52 = arith.constant dense<0.000000e+00> : vector<16x64xf32>
    %140 = tpu.matmul %138, %139, %cst_52 {dimension_numbers = #tpu.dot_dimension_numbers<[1], [0], [0], [1], [0, 0, 1, 1], [], []>} : vector<16x32xbf16>, vector<32x64xbf16>, vector<16x64xf32> -> vector<16x64xf32>
    %c0_53 = arith.constant 0 : index
    %c0_54 = arith.constant 0 : index
    %141 = vector.load %arg9[%c0_53, %c0_54] : memref<1x64xf32, #tpu.memory_space<vmem>>, vector<1x64xf32>
    %142 = vector.broadcast %141 : vector<1x64xf32> to vector<16x64xf32>
    %143 = arith.addf %140, %142 : vector<16x64xf32>
    %cst_55 = arith.constant 0.000000e+00 : f32
    %144 = vector.broadcast %cst_55 : f32 to vector<16x64xf32>
    %145 = arith.maximumf %143, %144 : vector<16x64xf32>
    %146 = arith.truncf %145 : vector<16x64xf32> to vector<16x64xbf16>
    %c0_56 = arith.constant 0 : index
    %c0_57 = arith.constant 0 : index
    %147 = vector.load %arg10[%c0_56, %c0_57] : memref<64x32xbf16, #tpu.memory_space<vmem>>, vector<64x32xbf16>
    %cst_58 = arith.constant dense<0.000000e+00> : vector<16x32xf32>
    %148 = tpu.matmul %146, %147, %cst_58 {dimension_numbers = #tpu.dot_dimension_numbers<[1], [0], [0], [1], [0, 0, 1, 1], [], []>} : vector<16x64xbf16>, vector<64x32xbf16>, vector<16x32xf32> -> vector<16x32xf32>
    %c0_59 = arith.constant 0 : index
    %c0_60 = arith.constant 0 : index
    %149 = vector.load %arg11[%c0_59, %c0_60] : memref<1x32xf32, #tpu.memory_space<vmem>>, vector<1x32xf32>
    %150 = vector.broadcast %149 : vector<1x32xf32> to vector<16x32xf32>
    %151 = arith.addf %148, %150 : vector<16x32xf32>
    %152 = arith.addf %137, %151 : vector<16x32xf32>
    %c0_61 = arith.constant 0 : index
    %c0_62 = arith.constant 0 : index
    %153 = vector.load %arg12[%c0_61, %c0_62] : memref<1x32xf32, #tpu.memory_space<vmem>>, vector<1x32xf32>
    %c0_63 = arith.constant 0 : index
    %c0_64 = arith.constant 0 : index
    %154 = vector.load %arg13[%c0_63, %c0_64] : memref<1x32xf32, #tpu.memory_space<vmem>>, vector<1x32xf32>
    %cst_65 = arith.constant dense<0.000000e+00> : vector<16xf32>
    %155 = vector.multi_reduction <add>, %152, %cst_65 [1] : vector<16x32xf32> to vector<16xf32>
    %156 = vector.shape_cast %155 : vector<16xf32> to vector<16x1xf32>
    %cst_66 = arith.constant 3.200000e+01 : f32
    %157 = vector.broadcast %cst_66 : f32 to vector<16x1xf32>
    %158 = arith.divf %156, %157 : vector<16x1xf32>
    %159 = vector.broadcast %158 : vector<16x1xf32> to vector<16x32xf32>
    %160 = arith.subf %152, %159 : vector<16x32xf32>
    %161 = arith.mulf %160, %160 : vector<16x32xf32>
    %cst_67 = arith.constant dense<0.000000e+00> : vector<16xf32>
    %162 = vector.multi_reduction <add>, %161, %cst_67 [1] : vector<16x32xf32> to vector<16xf32>
    %163 = vector.shape_cast %162 : vector<16xf32> to vector<16x1xf32>
    %cst_68 = arith.constant 3.200000e+01 : f32
    %164 = vector.broadcast %cst_68 : f32 to vector<16x1xf32>
    %165 = arith.divf %163, %164 : vector<16x1xf32>
    %cst_69 = arith.constant 9.99999974E-6 : f32
    %166 = vector.broadcast %cst_69 : f32 to vector<16x1xf32>
    %167 = arith.addf %165, %166 : vector<16x1xf32>
    %168 = math.rsqrt %167 : vector<16x1xf32>
    %169 = vector.broadcast %168 : vector<16x1xf32> to vector<16x32xf32>
    %170 = arith.mulf %160, %169 : vector<16x32xf32>
    %171 = vector.broadcast %153 : vector<1x32xf32> to vector<16x32xf32>
    %172 = arith.mulf %170, %171 : vector<16x32xf32>
    %173 = vector.broadcast %154 : vector<1x32xf32> to vector<16x32xf32>
    %174 = arith.addf %172, %173 : vector<16x32xf32>
    %175 = vector.shape_cast %174 : vector<16x32xf32> to vector<2x8x32xf32>
    %c0_70 = arith.constant 0 : index
    %c0_71 = arith.constant 0 : index
    %c0_72 = arith.constant 0 : index
    %176 = vector.load %arg14[%c0_70, %c0_71, %c0_72] : memref<2x8x32xf32, #tpu.memory_space<vmem>>, vector<2x8x32xf32>
    tpu.vector_store %arg14[%c0_70, %c0_71, %c0_72], %175 {strides = array<i32>} : memref<2x8x32xf32, #tpu.memory_space<vmem>>, vector<2x8x32xf32>,
    return
  }
  func.func @transform_0(%arg0: i32) -> (i32, i32, i32) {
    %c0_i32 = arith.constant 0 : i32
    %c0_i32_0 = arith.constant 0 : i32
    %c0_i32_1 = arith.constant 0 : i32
    return %arg0, %c0_i32, %c0_i32_0 : i32, i32, i32
  }
  func.func @transform_1(%arg0: i32) -> (i32, i32) {
    %c0_i32 = arith.constant 0 : i32
    %c0_i32_0 = arith.constant 0 : i32
    %c0_i32_1 = arith.constant 0 : i32
    return %c0_i32, %c0_i32_0 : i32, i32
  }
  func.func @transform_2(%arg0: i32) -> (i32, i32) {
    %c0_i32 = arith.constant 0 : i32
    %c0_i32_0 = arith.constant 0 : i32
    %c0_i32_1 = arith.constant 0 : i32
    return %c0_i32, %c0_i32_0 : i32, i32
  }
  func.func @transform_3(%arg0: i32) -> (i32, i32) {
    %c0_i32 = arith.constant 0 : i32
    %c0_i32_0 = arith.constant 0 : i32
    %c0_i32_1 = arith.constant 0 : i32
    return %c0_i32, %c0_i32_0 : i32, i32
  }
  func.func @transform_4(%arg0: i32) -> (i32, i32) {
    %c0_i32 = arith.constant 0 : i32
    %c0_i32_0 = arith.constant 0 : i32
    %c0_i32_1 = arith.constant 0 : i32
    return %c0_i32, %c0_i32_0 : i32, i32
  }
  func.func @transform_5(%arg0: i32) -> (i32, i32) {
    %c0_i32 = arith.constant 0 : i32
    %c0_i32_0 = arith.constant 0 : i32
    %c0_i32_1 = arith.constant 0 : i32
    return %c0_i32, %c0_i32_0 : i32, i32
  }
  func.func @transform_6(%arg0: i32) -> (i32, i32) {
    %c0_i32 = arith.constant 0 : i32
    %c0_i32_0 = arith.constant 0 : i32
    %c0_i32_1 = arith.constant 0 : i32
    return %c0_i32, %c0_i32_0 : i32, i32
  }
  func.func @transform_7(%arg0: i32) -> (i32, i32) {
    %c0_i32 = arith.constant 0 : i32
    %c0_i32_0 = arith.constant 0 : i32
    %c0_i32_1 = arith.constant 0 : i32
    return %c0_i32, %c0_i32_0 : i32, i32
  }
  func.func @transform_8(%arg0: i32) -> (i32, i32) {
    %c0_i32 = arith.constant 0 : i32
    %c0_i32_0 = arith.constant 0 : i32
    %c0_i32_1 = arith.constant 0 : i32
    return %c0_i32, %c0_i32_0 : i32, i32
  }
  func.func @transform_9(%arg0: i32) -> (i32, i32) {
    %c0_i32 = arith.constant 0 : i32
    %c0_i32_0 = arith.constant 0 : i32
    %c0_i32_1 = arith.constant 0 : i32
    return %c0_i32, %c0_i32_0 : i32, i32
  }
  func.func @transform_10(%arg0: i32) -> (i32, i32) {
    %c0_i32 = arith.constant 0 : i32
    %c0_i32_0 = arith.constant 0 : i32
    %c0_i32_1 = arith.constant 0 : i32
    return %c0_i32, %c0_i32_0 : i32, i32
  }
  func.func @transform_11(%arg0: i32) -> (i32, i32) {
    %c0_i32 = arith.constant 0 : i32
    %c0_i32_0 = arith.constant 0 : i32
    %c0_i32_1 = arith.constant 0 : i32
    return %c0_i32, %c0_i32_0 : i32, i32
  }
  func.func @transform_12(%arg0: i32) -> (i32, i32) {
    %c0_i32 = arith.constant 0 : i32
    %c0_i32_0 = arith.constant 0 : i32
    %c0_i32_1 = arith.constant 0 : i32
    return %c0_i32, %c0_i32_0 : i32, i32
  }
  func.func @transform_13(%arg0: i32) -> (i32, i32, i32) {
    %c0_i32 = arith.constant 0 : i32
    %c0_i32_0 = arith.constant 0 : i32
    %c0_i32_1 = arith.constant 0 : i32
    return %arg0, %c0_i32, %c0_i32_0 : i32, i32, i32
  }
}

</mosaic_0001>

<llo_original>
// kernel: tpu_custom_call.1
$region0: #{tpu_custom_call.1}
  #allocation0 [shape = 'u32[]', space=smem, size = 0x4, offset = 0x4, fixed_abs, tag = 'smem constant byte address 0x4 - core index']
  #allocation1 [shape = 'u32[144,128]{1,0:T(1,128)}', space=vmem, size = 0x12000, scoped, tag = 'internal scratch']
  #allocation2 [shape = 'f32[2,8,32]{2,1,0:T(8,128)}', space=vmem, size = 0x2000, scoped, tag = 'scratch operand']
  %s0 = inlined_call_operand.vmem [shape: f32[2,8,32], index: 0, kind: input, shape index: {}]
  %s1 = inlined_call_operand.vmem [shape: bf16[32,96], index: 1, kind: input, shape index: {}]
  %s2 = inlined_call_operand.hbm [shape: f32[1,96], index: 2, kind: input, shape index: {}]
  %s3 = inlined_call_operand.vmem [shape: bf16[32,32], index: 3, kind: input, shape index: {}]
  %s4 = inlined_call_operand.hbm [shape: f32[1,32], index: 4, kind: input, shape index: {}]
  %s5 = inlined_call_operand.hbm [shape: f32[1,32], index: 5, kind: input, shape index: {}]
  %s6 = inlined_call_operand.hbm [shape: f32[1,32], index: 6, kind: input, shape index: {}]
  %s7 = inlined_call_operand.hbm [shape: bf16[32,64], index: 7, kind: input, shape index: {}]
  %s8 = inlined_call_operand.hbm [shape: f32[1,64], index: 8, kind: input, shape index: {}]
  %s9 = inlined_call_operand.vmem [shape: bf16[64,32], index: 9, kind: input, shape index: {}]
  %s10 = inlined_call_operand.vmem [shape: f32[1,32], index: 10, kind: input, shape index: {}]
  %s11 = inlined_call_operand.vmem [shape: f32[1,32], index: 11, kind: input, shape index: {}]
  %s12 = inlined_call_operand.vmem [shape: f32[1,32], index: 12, kind: input, shape index: {}]
  %s13 = inlined_call_operand.hbm [shape: f32[2,8,32], index: 13, kind: output, shape index: {}]
  %s14 = sld [smem:[#allocation0]]
  $region86: #{tpu_custom_call.1} parent=0
    _
  %s16 = ssub.s32 1, %s14
  %s17 = scalar_select 0, %s16, %s14
  $region1: #{tpu_custom_call.1} parent=0
    #allocation3 [shape = 'u8[512]{0}', space=vmem, size = 0x400, scoped, tag = 'input window, operand 2, single buffered']
    #allocation4 [shape = 's32[1]{0}', space=sflag, size = 0x4, scoped, tag = 'scoped memory for tpu_custom_call.1']
    #allocation5 [shape = 's32[1]{0}', space=sflag, size = 0x4, scoped, tag = 'scoped memory for tpu_custom_call.1']
    #allocation6 [shape = 'u8[512]{0}', space=vmem, size = 0x400, scoped, tag = 'input window, operand 4, single buffered']
    #allocation7 [shape = 's32[1]{0}', space=sflag, size = 0x4, scoped, tag = 'scoped memory for tpu_custom_call.1']
    #allocation8 [shape = 'u8[512]{0}', space=vmem, size = 0x400, scoped, tag = 'input window, operand 5, single buffered']
    #allocation9 [shape = 'u8[512]{0}', space=vmem, size = 0x400, scoped, tag = 'input window, operand 6, single buffered']
    #allocation10 [shape = 's32[1]{0}', space=sflag, size = 0x4, scoped, tag = 'scoped memory for tpu_custom_call.1']
    #allocation11 [shape = 'u8[8192]{0}', space=vmem, size = 0x2000, scoped, tag = 'input window, operand 7, single buffered']
    #allocation12 [shape = 'u8[512]{0}', space=vmem, size = 0x400, scoped, tag = 'input window, operand 8, single buffered']
    #allocation13 [shape = 's32[1]{0}', space=sflag, size = 0x4, scoped, tag = 'scoped memory for tpu_custom_call.1']
    #allocation14 [shape = 'u8[8192]{0}', space=vmem, size = 0x2000, scoped, tag = 'output window, operand 0, single buffered']
    %18 = vsyncpa [#allocation4], 0
    %19 = vsyncpa [#allocation7], 0
    %20 = vsyncpa [#allocation10], 0
    %21 = vsyncpa [#allocation13], 0
    %22 = vsyncpa [#allocation5], 0
    // Predicated region
    $region2: #{tpu_custom_call.1} parent=1 // pred_check
      _
    $region3: #{tpu_custom_call.1} parent=1 // pred_check_branch
      %24 = sbr.rel (0) target = $region5
    $region4: #{tpu_custom_call.1} parent=1 // pred_region
      _
    $region5: #{tpu_custom_call.1} parent=1 // pred_fallthru
      _
    // Predicated region
    $region6: #{tpu_custom_call.1} parent=1 // pred_check
      _
    $region7: #{tpu_custom_call.1} parent=1 // pred_check_branch
      %26 = sbr.rel (0) target = $region9
    $region8: #{tpu_custom_call.1} parent=1 // pred_region
      _
    $region9: #{tpu_custom_call.1} parent=1 // pred_fallthru
      _
    // Predicated region
    $region10: #{tpu_custom_call.1} parent=1 // pred_check
      _
    $region11: #{tpu_custom_call.1} parent=1 // pred_check_branch
      %28 = sbr.rel (0) target = $region13
    $region12: #{tpu_custom_call.1} parent=1 // pred_region
      %s30 = ssub.s32 16, 16
      %31 = vsyncadd [#allocation4], %s30
      %s33 = sshll.u32 [#allocation3], 4
      %s34 = int_to_ptr.vmem [resolvable:$true] %s33
      %36 = dma.hbm_to_vmem [thread:$0]  %s2, 16, %s34, [#allocation4]
    $region13: #{tpu_custom_call.1} parent=1 // pred_fallthru
      _
    // Predicated region
    $region14: #{tpu_custom_call.1} parent=1 // pred_check
      _
    $region15: #{tpu_custom_call.1} parent=1 // pred_check_branch
      %38 = sbr.rel (0) target = $region17
    $region16: #{tpu_custom_call.1} parent=1 // pred_region
      _
    $region17: #{tpu_custom_call.1} parent=1 // pred_fallthru
      _
    // Predicated region
    $region18: #{tpu_custom_call.1} parent=1 // pred_check
      _
    $region19: #{tpu_custom_call.1} parent=1 // pred_check_branch
      %40 = sbr.rel (0) target = $region21
    $region20: #{tpu_custom_call.1} parent=1 // pred_region
      %s42 = ssub.s32 16, 16
      %43 = vsyncadd [#allocation7], %s42
      %s45 = sshll.u32 [#allocation6], 4
      %s46 = int_to_ptr.vmem [resolvable:$true] %s45
      %48 = dma.hbm_to_vmem [thread:$0]  %s4, 16, %s46, [#allocation7]
    $region21: #{tpu_custom_call.1} parent=1 // pred_fallthru
      _
    // Predicated region
    $region22: #{tpu_custom_call.1} parent=1 // pred_check
      _
    $region23: #{tpu_custom_call.1} parent=1 // pred_check_branch
      %50 = sbr.rel (0) target = $region25
    $region24: #{tpu_custom_call.1} parent=1 // pred_region
      %s52 = ssub.s32 16, 16
      %53 = vsyncadd [#allocation7], %s52
      %s55 = sshll.u32 [#allocation8], 4
      %s56 = int_to_ptr.vmem [resolvable:$true] %s55
      %58 = dma.hbm_to_vmem [thread:$0]  %s5, 16, %s56, [#allocation7]
    $region25: #{tpu_custom_call.1} parent=1 // pred_fallthru
      _
    // Predicated region
    $region26: #{tpu_custom_call.1} parent=1 // pred_check
      _
    $region27: #{tpu_custom_call.1} parent=1 // pred_check_branch
      %60 = sbr.rel (0) target = $region29
    $region28: #{tpu_custom_call.1} parent=1 // pred_region
      %s62 = ssub.s32 16, 16
      %63 = vsyncadd [#allocation10], %s62
      %s65 = sshll.u32 [#allocation9], 4
      %s66 = int_to_ptr.vmem [resolvable:$true] %s65
      %68 = dma.hbm_to_vmem [thread:$0]  %s6, 16, %s66, [#allocation10]
    $region29: #{tpu_custom_call.1} parent=1 // pred_fallthru
      _
    // Predicated region
    $region30: #{tpu_custom_call.1} parent=1 // pred_check
      _
    $region31: #{tpu_custom_call.1} parent=1 // pred_check_branch
      %70 = sbr.rel (0) target = $region33
    $region32: #{tpu_custom_call.1} parent=1 // pred_region
      %s72 = ssub.s32 256, 256
      %73 = vsyncadd [#allocation10], %s72
      %s74 = sshll.u32 [#allocation11], 4
      %s75 = int_to_ptr.vmem [resolvable:$true] %s74
      %80 = dma.hbm_to_vmem [thread:$0]  %s7, 256, %s75, [#allocation10], 64, 64, 4
    $region33: #{tpu_custom_call.1} parent=1 // pred_fallthru
      _
    // Predicated region
    $region34: #{tpu_custom_call.1} parent=1 // pred_check
      _
    $region35: #{tpu_custom_call.1} parent=1 // pred_check_branch
      %82 = sbr.rel (0) target = $region37
    $region36: #{tpu_custom_call.1} parent=1 // pred_region
      %s84 = ssub.s32 16, 16
      %85 = vsyncadd [#allocation13], %s84
      %s87 = sshll.u32 [#allocation12], 4
      %s88 = int_to_ptr.vmem [resolvable:$true] %s87
      %90 = dma.hbm_to_vmem [thread:$0]  %s8, 16, %s88, [#allocation13]
    $region37: #{tpu_custom_call.1} parent=1 // pred_fallthru
      _
    // Predicated region
    $region38: #{tpu_custom_call.1} parent=1 // pred_check
      _
    $region39: #{tpu_custom_call.1} parent=1 // pred_check_branch
      %92 = sbr.rel (0) target = $region41
    $region40: #{tpu_custom_call.1} parent=1 // pred_region
      _
    $region41: #{tpu_custom_call.1} parent=1 // pred_fallthru
      _
    // Predicated region
    $region42: #{tpu_custom_call.1} parent=1 // pred_check
      _
    $region43: #{tpu_custom_call.1} parent=1 // pred_check_branch
      %94 = sbr.rel (0) target = $region45
    $region44: #{tpu_custom_call.1} parent=1 // pred_region
      _
    $region45: #{tpu_custom_call.1} parent=1 // pred_fallthru
      _
    // Predicated region
    $region46: #{tpu_custom_call.1} parent=1 // pred_check
      _
    $region47: #{tpu_custom_call.1} parent=1 // pred_check_branch
      %96 = sbr.rel (0) target = $region49
    $region48: #{tpu_custom_call.1} parent=1 // pred_region
      _
    $region49: #{tpu_custom_call.1} parent=1 // pred_fallthru
      _
    // Predicated region
    $region50: #{tpu_custom_call.1} parent=1 // pred_check
      _
    $region51: #{tpu_custom_call.1} parent=1 // pred_check_branch
      %98 = sbr.rel (0) target = $region53
    $region52: #{tpu_custom_call.1} parent=1 // pred_region
      _
    $region53: #{tpu_custom_call.1} parent=1 // pred_fallthru
      _
    // Predicated region
    $region54: #{tpu_custom_call.1} parent=1 // pred_check
      _
    $region55: #{tpu_custom_call.1} parent=1 // pred_check_branch
      %100 = sbr.rel (0) target = $region57
    $region56: #{tpu_custom_call.1} parent=1 // pred_region
      %101 = dma.done [#allocation4], 16
    $region57: #{tpu_custom_call.1} parent=1 // pred_fallthru
      _
    // Predicated region
    $region58: #{tpu_custom_call.1} parent=1 // pred_check
      _
    $region59: #{tpu_custom_call.1} parent=1 // pred_check_branch
      %103 = sbr.rel (0) target = $region61
    $region60: #{tpu_custom_call.1} parent=1 // pred_region
      %104 = dma.done [#allocation7], 16
    $region61: #{tpu_custom_call.1} parent=1 // pred_fallthru
      _
    // Predicated region
    $region62: #{tpu_custom_call.1} parent=1 // pred_check
      _
    $region63: #{tpu_custom_call.1} parent=1 // pred_check_branch
      %106 = sbr.rel (0) target = $region65
    $region64: #{tpu_custom_call.1} parent=1 // pred_region
      %107 = dma.done [#allocation7], 16
    $region65: #{tpu_custom_call.1} parent=1 // pred_fallthru
      _
    // Predicated region
    $region66: #{tpu_custom_call.1} parent=1 // pred_check
      _
    $region67: #{tpu_custom_call.1} parent=1 // pred_check_branch
      %109 = sbr.rel (0) target = $region69
    $region68: #{tpu_custom_call.1} parent=1 // pred_region
      %110 = dma.done [#allocation10], 16
    $region69: #{tpu_custom_call.1} parent=1 // pred_fallthru
      _
    // Predicated region
    $region70: #{tpu_custom_call.1} parent=1 // pred_check
      _
    $region71: #{tpu_custom_call.1} parent=1 // pred_check_branch
      %112 = sbr.rel (0) target = $region73
    $region72: #{tpu_custom_call.1} parent=1 // pred_region
      %113 = dma.done [#allocation10], 256
    $region73: #{tpu_custom_call.1} parent=1 // pred_fallthru
      _
    // Predicated region
    $region74: #{tpu_custom_call.1} parent=1 // pred_check
      _
    $region75: #{tpu_custom_call.1} parent=1 // pred_check_branch
      %115 = sbr.rel (0) target = $region77
    $region76: #{tpu_custom_call.1} parent=1 // pred_region
      %116 = dma.done [#allocation13], 16
    $region77: #{tpu_custom_call.1} parent=1 // pred_fallthru
      _
    %v118 = vld [vmem:[%s0] sm:$0xff]
    %v119 = vld [vmem:[%s0 + $0x8] sm:$0xff]
    %v120 = vpack.c.bf16 %v119, %v118
    %v121 = vld [vmem:[%s1] sm:$0xf]
    %v122 = vld [vmem:[%s1 + $0x4] sm:$0xf]
    %v123 = vld [vmem:[%s1 + $0x8] sm:$0xf]
    %v124 = vld [vmem:[%s1 + $0xc] sm:$0xf]
    %v125 = vld [vmem:[#allocation3] sm:$0x1]
    %v127 = vlaneseq
    %v128 = vshrl.u32 %v127, 7
    %v129 = vsub.s32 0, %v128
    %v130 = vrot.slane %v125, %v129
    %v136 = vunpack.c.l.b16 %v121
    %v137 = vunpack.c.l.b16 %v122
    %v138 = vunpack.c.l.b16 %v123
    %v139 = vunpack.c.l.b16 %v124
    %v140 = vpack.c.b16 %v137, %v136
    %v141 = vpack.c.b16 %v139, %v138
    %vm144 = vcmask 261120
    %v146 = vsel %vm144, %v120, 0
    %148 = vmatprep.subr.bf16.mxu0 0
    %149 = vmatpush1.bf16.msra.mxu0 0
    %150 = vmatprep.subr.bf16.mxu0 0
    %151 = vmatpush1.bf16.msra.mxu0 0
    %152 = vmatprep.subr.bf16.mxu0 0
    %153 = vmatpush1.bf16.msra.mxu0 0
    %154 = vmatprep.subr.bf16.mxu0 0
    %155 = vmatpush1.bf16.msra.mxu0 0
    %156 = vmatprep.subr.bf16.mxu0 0
    %157 = vmatpush1.bf16.msra.mxu0 0
    %158 = vmatprep.subr.bf16.mxu0 0
    %159 = vmatpush1.bf16.msra.mxu0 0
    %160 = vmatprep.subr.bf16.mxu0 0
    %161 = vmatpush1.bf16.msra.mxu0 %v141
    %162 = vmatprep.subr.bf16.mxu0 0
    %163 = vmatpush1.bf16.msra.mxu0 %v140
    %164 = vmatprep.subr.bf16.mxu0 0
    %165 = vmatpush2.bf16.msra.mxu0 0
    %166 = vmatprep.subr.bf16.mxu0 0
    %167 = vmatpush2.bf16.msra.mxu0 0
    %168 = vmatprep.subr.bf16.mxu0 0
    %169 = vmatpush2.bf16.msra.mxu0 0
    %170 = vmatprep.subr.bf16.mxu0 0
    %171 = vmatpush2.bf16.msra.mxu0 0
    %172 = vmatprep.subr.bf16.mxu0 0
    %173 = vmatpush2.bf16.msra.mxu0 0
    %174 = vmatprep.subr.bf16.mxu0 0
    %175 = vmatpush2.bf16.msra.mxu0 0
    %176 = vmatprep.subr.bf16.mxu0 0
    %177 = vmatpush2.bf16.msra.mxu0 0
    %178 = vmatprep.subr.bf16.mxu0 0
    %179 = vmatpush2.bf16.msra.mxu0 0
    %180 = vmatprep.mubr.bf16.mxu0 0
    %181 = vmatmul.mubr.bf16.gmra.mxu0 %v146
    %v182 = vpop.f32.mrf.mxu0
    %v183 = vadd.f32 %v130, %v182
    %v184 = vpop.f32.mrf.mxu0
    %v185 = vpop.f32.mrf.mxu0
    %v186 = vadd.f32 %v130, %v185
    %v187 = vpop.f32.mrf.mxu0
    %188 = vdwg.mxu0
    %v189 = vlaneseq
    %v190 = vshrl.u32 %v189, 7
    %v191 = vlaneseq
    %v192 = vand.u32 %v191, 127
    %vm193 = vcmp.gt.s32.totalorder %v192, %v190
    %v194 = vsel %vm193, -1e+30, 0.0
    %v195 = vpack.c.bf16 %v183, %v183
    %v196 = vpack.c.bf16 %v186, %v186
    %198 = vrot.lane.b32.xlu0 %v195, 96
    %v199 = vpop.permute.xlu0 %198
    %vm200 = vcmask 64512
    %v202 = vsel %vm200, %v195, 0
    %v205 = vsel %vm200, %v199, 0
    %207 = vmatprep.subr.bf16.mxu0 0
    %208 = vmatpush1.bf16.xpose.msra.mxu0 0
    %209 = vmatprep.subr.bf16.mxu0 0
    %210 = vmatpush1.bf16.xpose.msra.mxu0 0
    %211 = vmatprep.subr.bf16.mxu0 0
    %212 = vmatpush1.bf16.xpose.msra.mxu0 0
    %213 = vmatprep.subr.bf16.mxu0 0
    %214 = vmatpush1.bf16.xpose.msra.mxu0 0
    %215 = vmatprep.subr.bf16.mxu0 0
    %216 = vmatpush1.bf16.xpose.msra.mxu0 0
    %217 = vmatprep.subr.bf16.mxu0 0
    %218 = vmatpush1.bf16.xpose.msra.mxu0 0
    %219 = vmatprep.subr.bf16.mxu0 0
    %220 = vmatpush1.bf16.xpose.msra.mxu0 0
    %221 = vmatprep.subr.bf16.mxu0 0
    %222 = vmatpush1.bf16.xpose.msra.mxu0 %v205
    %223 = vmatprep.subr.bf16.mxu0 0
    %224 = vmatpush2.bf16.xpose.msra.mxu0 0
    %225 = vmatprep.subr.bf16.mxu0 0
    %226 = vmatpush2.bf16.xpose.msra.mxu0 0
    %227 = vmatprep.subr.bf16.mxu0 0
    %228 = vmatpush2.bf16.xpose.msra.mxu0 0
    %229 = vmatprep.subr.bf16.mxu0 0
    %230 = vmatpush2.bf16.xpose.msra.mxu0 0
    %231 = vmatprep.subr.bf16.mxu0 0
    %232 = vmatpush2.bf16.xpose.msra.mxu0 0
    %233 = vmatprep.subr.bf16.mxu0 0
    %234 = vmatpush2.bf16.xpose.msra.mxu0 0
    %235 = vmatprep.subr.bf16.mxu0 0
    %236 = vmatpush2.bf16.xpose.msra.mxu0 0
    %237 = vmatprep.subr.bf16.mxu0 0
    %238 = vmatpush2.bf16.xpose.msra.mxu0 0
    %239 = vmatprep.mubr.bf16.mxu0 0
    %240 = vmatmul.mubr.bf16.gmra.mxu0 %v202
    %v241 = vpop.f32.mrf.mxu0
    %v242 = vadd.f32 %v194, %v241
    %v243 = vpop.f32.mrf.mxu0
    %v244 = vpop.f32.mrf.mxu0
    %v245 = vpop.f32.mrf.mxu0
    %246 = vdwg.mxu0
    %248 = vrot.lane.b32.xlu0 %v196, 96
    %v249 = vpop.permute.xlu0 %248
    %v251 = vsel %vm200, %v196, 0
    %v254 = vsel %vm200, %v249, 0
    %256 = vmatprep.subr.bf16.mxu0 0
    %257 = vmatpush1.bf16.xpose.msra.mxu0 0
    %258 = vmatprep.subr.bf16.mxu0 0
    %259 = vmatpush1.bf16.xpose.msra.mxu0 0
    %260 = vmatprep.subr.bf16.mxu0 0
    %261 = vmatpush1.bf16.xpose.msra.mxu0 0
    %262 = vmatprep.subr.bf16.mxu0 0
    %263 = vmatpush1.bf16.xpose.msra.mxu0 0
    %264 = vmatprep.subr.bf16.mxu0 0
    %265 = vmatpush1.bf16.xpose.msra.mxu0 0
    %266 = vmatprep.subr.bf16.mxu0 0
    %267 = vmatpush1.bf16.xpose.msra.mxu0 0
    %268 = vmatprep.subr.bf16.mxu0 0
    %269 = vmatpush1.bf16.xpose.msra.mxu0 0
    %270 = vmatprep.subr.bf16.mxu0 0
    %271 = vmatpush1.bf16.xpose.msra.mxu0 %v254
    %272 = vmatprep.subr.bf16.mxu0 0
    %273 = vmatpush2.bf16.xpose.msra.mxu0 0
    %274 = vmatprep.subr.bf16.mxu0 0
    %275 = vmatpush2.bf16.xpose.msra.mxu0 0
    %276 = vmatprep.subr.bf16.mxu0 0
    %277 = vmatpush2.bf16.xpose.msra.mxu0 0
    %278 = vmatprep.subr.bf16.mxu0 0
    %279 = vmatpush2.bf16.xpose.msra.mxu0 0
    %280 = vmatprep.subr.bf16.mxu0 0
    %281 = vmatpush2.bf16.xpose.msra.mxu0 0
    %282 = vmatprep.subr.bf16.mxu0 0
    %283 = vmatpush2.bf16.xpose.msra.mxu0 0
    %284 = vmatprep.subr.bf16.mxu0 0
    %285 = vmatpush2.bf16.xpose.msra.mxu0 0
    %286 = vmatprep.subr.bf16.mxu0 0
    %287 = vmatpush2.bf16.xpose.msra.mxu0 0
    %288 = vmatprep.mubr.bf16.mxu0 0
    %289 = vmatmul.mubr.bf16.gmra.mxu0 %v251
    %v290 = vpop.f32.mrf.mxu0
    %v291 = vadd.f32 %v194, %v290
    %v292 = vpop.f32.mrf.mxu0
    %v293 = vpop.f32.mrf.mxu0
    %v294 = vpop.f32.mrf.mxu0
    %295 = vdwg.mxu0
    %v296 = vsel %vm200, %v242, -inf
    %297 = vmax.xlane.f32.xlu0 %v296
    %v298 = vpop.xlane.xlu0 %297
    %v299 = vsel %vm200, %v291, -inf
    %300 = vmax.xlane.f32.xlu0 %v299
    %v301 = vpop.xlane.xlu0 %300
    %v302 = vsub.f32 %v242, %v298
    %v303 = vsub.f32 %v291, %v301
    %v304 = vmul.f32 %v302, 1.442695
    %v305 = vpow.pop %v304
    %v306 = vmul.f32 %v303, 1.442695
    %v307 = vpow.pop %v306
    %v308 = vsel %vm200, %v305, 0.0
    %309 = vadd.xlane.f32.xlu0 %v308
    %v310 = vpop.xlane.xlu0 %309
    %v311 = vsel %vm200, %v307, 0.0
    %312 = vadd.xlane.f32.xlu0 %v311
    %v313 = vpop.xlane.xlu0 %312
    %v314 = vpack.c.bf16 %v305, %v305
    %v315 = vpack.c.bf16 %v307, %v307
    %316 = vrot.lane.b32.xlu0 %v195, 64
    %v317 = vpop.permute.xlu0 %316
    %v319 = vsel %vm200, %v314, 0
    %vm321 = vcmask 1043456
    %v323 = vsel %vm321, %v317, 0
    %325 = vmatprep.subr.bf16.mxu0 0
    %326 = vmatpush1.bf16.msra.mxu0 0
    %327 = vmatprep.subr.bf16.mxu0 0
    %328 = vmatpush1.bf16.msra.mxu0 0
    %329 = vmatprep.subr.bf16.mxu0 0
    %330 = vmatpush1.bf16.msra.mxu0 0
    %331 = vmatprep.subr.bf16.mxu0 0
    %332 = vmatpush1.bf16.msra.mxu0 0
    %333 = vmatprep.subr.bf16.mxu0 0
    %334 = vmatpush1.bf16.msra.mxu0 0
    %335 = vmatprep.subr.bf16.mxu0 0
    %336 = vmatpush1.bf16.msra.mxu0 0
    %337 = vmatprep.subr.bf16.mxu0 0
    %338 = vmatpush1.bf16.msra.mxu0 0
    %339 = vmatprep.subr.bf16.mxu0 0
    %340 = vmatpush1.bf16.msra.mxu0 %v323
    %341 = vmatprep.subr.bf16.mxu0 0
    %342 = vmatpush2.bf16.msra.mxu0 0
    %343 = vmatprep.subr.bf16.mxu0 0
    %344 = vmatpush2.bf16.msra.mxu0 0
    %345 = vmatprep.subr.bf16.mxu0 0
    %346 = vmatpush2.bf16.msra.mxu0 0
    %347 = vmatprep.subr.bf16.mxu0 0
    %348 = vmatpush2.bf16.msra.mxu0 0
    %349 = vmatprep.subr.bf16.mxu0 0
    %350 = vmatpush2.bf16.msra.mxu0 0
    %351 = vmatprep.subr.bf16.mxu0 0
    %352 = vmatpush2.bf16.msra.mxu0 0
    %353 = vmatprep.subr.bf16.mxu0 0
    %354 = vmatpush2.bf16.msra.mxu0 0
    %355 = vmatprep.subr.bf16.mxu0 0
    %356 = vmatpush2.bf16.msra.mxu0 0
    %357 = vmatprep.mubr.bf16.mxu0 0
    %358 = vmatmul.mubr.bf16.gmra.mxu0 %v319
    %v359 = vpop.f32.mrf.mxu0
    %v360 = vadd.f32 0.0, %v359
    %v361 = vpop.f32.mrf.mxu0
    %v362 = vpop.f32.mrf.mxu0
    %v363 = vpop.f32.mrf.mxu0
    %364 = vdwg.mxu0
    %365 = vrot.lane.b32.xlu0 %v196, 64
    %v366 = vpop.permute.xlu0 %365
    %v368 = vsel %vm200, %v315, 0
    %v371 = vsel %vm321, %v366, 0
    %373 = vmatprep.subr.bf16.mxu0 0
    %374 = vmatpush1.bf16.msra.mxu0 0
    %375 = vmatprep.subr.bf16.mxu0 0
    %376 = vmatpush1.bf16.msra.mxu0 0
    %377 = vmatprep.subr.bf16.mxu0 0
    %378 = vmatpush1.bf16.msra.mxu0 0
    %379 = vmatprep.subr.bf16.mxu0 0
    %380 = vmatpush1.bf16.msra.mxu0 0
    %381 = vmatprep.subr.bf16.mxu0 0
    %382 = vmatpush1.bf16.msra.mxu0 0
    %383 = vmatprep.subr.bf16.mxu0 0
    %384 = vmatpush1.bf16.msra.mxu0 0
    %385 = vmatprep.subr.bf16.mxu0 0
    %386 = vmatpush1.bf16.msra.mxu0 0
    %387 = vmatprep.subr.bf16.mxu0 0
    %388 = vmatpush1.bf16.msra.mxu0 %v371
    %389 = vmatprep.subr.bf16.mxu0 0
    %390 = vmatpush2.bf16.msra.mxu0 0
    %391 = vmatprep.subr.bf16.mxu0 0
    %392 = vmatpush2.bf16.msra.mxu0 0
    %393 = vmatprep.subr.bf16.mxu0 0
    %394 = vmatpush2.bf16.msra.mxu0 0
    %395 = vmatprep.subr.bf16.mxu0 0
    %396 = vmatpush2.bf16.msra.mxu0 0
    %397 = vmatprep.subr.bf16.mxu0 0
    %398 = vmatpush2.bf16.msra.mxu0 0
    %399 = vmatprep.subr.bf16.mxu0 0
    %400 = vmatpush2.bf16.msra.mxu0 0
    %401 = vmatprep.subr.bf16.mxu0 0
    %402 = vmatpush2.bf16.msra.mxu0 0
    %403 = vmatprep.subr.bf16.mxu0 0
    %404 = vmatpush2.bf16.msra.mxu0 0
    %405 = vmatprep.mubr.bf16.mxu0 0
    %406 = vmatmul.mubr.bf16.gmra.mxu0 %v368
    %v407 = vpop.f32.mrf.mxu0
    %v408 = vadd.f32 0.0, %v407
    %v409 = vpop.f32.mrf.mxu0
    %v410 = vpop.f32.mrf.mxu0
    %v411 = vpop.f32.mrf.mxu0
    %412 = vdwg.mxu0
    %v413 = vrcp.pop %v310
    %v414 = vrcp.pop %v313
    %v415 = vmul.f32 %v360, %v413
    %v416 = vmul.f32 %v408, %v414
    %417 = vst.msk [vmem:[#allocation2] sm:$0xff] %vm200, %v415
    %418 = vst.msk [vmem:[#allocation2 + $0x8] sm:$0xff] %vm200, %v416
    %419 = vrot.lane.b32.xlu0 %v195, 120
    %v420 = vpop.permute.xlu0 %419
    %421 = vrot.lane.b32.xlu0 %v195, 88
    %v422 = vpop.permute.xlu0 %421
    %v424 = vsel %vm200, %v420, 0
    %v427 = vsel %vm200, %v422, 0
    %429 = vmatprep.subr.bf16.mxu0 0
    %430 = vmatpush1.bf16.xpose.msra.mxu0 0
    %431 = vmatprep.subr.bf16.mxu0 0
    %432 = vmatpush1.bf16.xpose.msra.mxu0 0
    %433 = vmatprep.subr.bf16.mxu0 0
    %434 = vmatpush1.bf16.xpose.msra.mxu0 0
    %435 = vmatprep.subr.bf16.mxu0 0
    %436 = vmatpush1.bf16.xpose.msra.mxu0 0
    %437 = vmatprep.subr.bf16.mxu0 0
    %438 = vmatpush1.bf16.xpose.msra.mxu0 0
    %439 = vmatprep.subr.bf16.mxu0 0
    %440 = vmatpush1.bf16.xpose.msra.mxu0 0
    %441 = vmatprep.subr.bf16.mxu0 0
    %442 = vmatpush1.bf16.xpose.msra.mxu0 0
    %443 = vmatprep.subr.bf16.mxu0 0
    %444 = vmatpush1.bf16.xpose.msra.mxu0 %v427
    %445 = vmatprep.subr.bf16.mxu0 0
    %446 = vmatpush2.bf16.xpose.msra.mxu0 0
    %447 = vmatprep.subr.bf16.mxu0 0
    %448 = vmatpush2.bf16.xpose.msra.mxu0 0
    %449 = vmatprep.subr.bf16.mxu0 0
    %450 = vmatpush2.bf16.xpose.msra.mxu0 0
    %451 = vmatprep.subr.bf16.mxu0 0
    %452 = vmatpush2.bf16.xpose.msra.mxu0 0
    %453 = vmatprep.subr.bf16.mxu0 0
    %454 = vmatpush2.bf16.xpose.msra.mxu0 0
    %455 = vmatprep.subr.bf16.mxu0 0
    %456 = vmatpush2.bf16.xpose.msra.mxu0 0
    %457 = vmatprep.subr.bf16.mxu0 0
    %458 = vmatpush2.bf16.xpose.msra.mxu0 0
    %459 = vmatprep.subr.bf16.mxu0 0
    %460 = vmatpush2.bf16.xpose.msra.mxu0 0
    %461 = vmatprep.mubr.bf16.mxu0 0
    %462 = vmatmul.mubr.bf16.gmra.mxu0 %v424
    %v463 = vpop.f32.mrf.mxu0
    %v464 = vadd.f32 %v194, %v463
    %v465 = vpop.f32.mrf.mxu0
    %v466 = vpop.f32.mrf.mxu0
    %v467 = vpop.f32.mrf.mxu0
    %468 = vdwg.mxu0
    %469 = vrot.lane.b32.xlu0 %v196, 120
    %v470 = vpop.permute.xlu0 %469
    %471 = vrot.lane.b32.xlu0 %v196, 88
    %v472 = vpop.permute.xlu0 %471
    %v474 = vsel %vm200, %v470, 0
    %v477 = vsel %vm200, %v472, 0
    %479 = vmatprep.subr.bf16.mxu0 0
    %480 = vmatpush1.bf16.xpose.msra.mxu0 0
    %481 = vmatprep.subr.bf16.mxu0 0
    %482 = vmatpush1.bf16.xpose.msra.mxu0 0
    %483 = vmatprep.subr.bf16.mxu0 0
    %484 = vmatpush1.bf16.xpose.msra.mxu0 0
    %485 = vmatprep.subr.bf16.mxu0 0
    %486 = vmatpush1.bf16.xpose.msra.mxu0 0
    %487 = vmatprep.subr.bf16.mxu0 0
    %488 = vmatpush1.bf16.xpose.msra.mxu0 0
    %489 = vmatprep.subr.bf16.mxu0 0
    %490 = vmatpush1.bf16.xpose.msra.mxu0 0
    %491 = vmatprep.subr.bf16.mxu0 0
    %492 = vmatpush1.bf16.xpose.msra.mxu0 0
    %493 = vmatprep.subr.bf16.mxu0 0
    %494 = vmatpush1.bf16.xpose.msra.mxu0 %v477
    %495 = vmatprep.subr.bf16.mxu0 0
    %496 = vmatpush2.bf16.xpose.msra.mxu0 0
    %497 = vmatprep.subr.bf16.mxu0 0
    %498 = vmatpush2.bf16.xpose.msra.mxu0 0
    %499 = vmatprep.subr.bf16.mxu0 0
    %500 = vmatpush2.bf16.xpose.msra.mxu0 0
    %501 = vmatprep.subr.bf16.mxu0 0
    %502 = vmatpush2.bf16.xpose.msra.mxu0 0
    %503 = vmatprep.subr.bf16.mxu0 0
    %504 = vmatpush2.bf16.xpose.msra.mxu0 0
    %505 = vmatprep.subr.bf16.mxu0 0
    %506 = vmatpush2.bf16.xpose.msra.mxu0 0
    %507 = vmatprep.subr.bf16.mxu0 0
    %508 = vmatpush2.bf16.xpose.msra.mxu0 0
    %509 = vmatprep.subr.bf16.mxu0 0
    %510 = vmatpush2.bf16.xpose.msra.mxu0 0
    %511 = vmatprep.mubr.bf16.mxu0 0
    %512 = vmatmul.mubr.bf16.gmra.mxu0 %v474
    %v513 = vpop.f32.mrf.mxu0
    %v514 = vadd.f32 %v194, %v513
    %v515 = vpop.f32.mrf.mxu0
    %v516 = vpop.f32.mrf.mxu0
    %v517 = vpop.f32.mrf.mxu0
    %518 = vdwg.mxu0
    %v519 = vsel %vm200, %v464, -inf
    %520 = vmax.xlane.f32.xlu0 %v519
    %v521 = vpop.xlane.xlu0 %520
    %v522 = vsel %vm200, %v514, -inf
    %523 = vmax.xlane.f32.xlu0 %v522
    %v524 = vpop.xlane.xlu0 %523
    %v525 = vsub.f32 %v464, %v521
    %v526 = vsub.f32 %v514, %v524
    %v527 = vmul.f32 %v525, 1.442695
    %v528 = vpow.pop %v527
    %v529 = vmul.f32 %v526, 1.442695
    %v530 = vpow.pop %v529
    %v531 = vsel %vm200, %v528, 0.0
    %532 = vadd.xlane.f32.xlu0 %v531
    %v533 = vpop.xlane.xlu0 %532
    %v534 = vsel %vm200, %v530, 0.0
    %535 = vadd.xlane.f32.xlu0 %v534
    %v536 = vpop.xlane.xlu0 %535
    %v537 = vpack.c.bf16 %v528, %v528
    %v538 = vpack.c.bf16 %v530, %v530
    %539 = vrot.lane.b32.xlu0 %v195, 56
    %v540 = vpop.permute.xlu0 %539
    %v542 = vsel %vm200, %v537, 0
    %v545 = vsel %vm321, %v540, 0
    %547 = vmatprep.subr.bf16.mxu0 0
    %548 = vmatpush1.bf16.msra.mxu0 0
    %549 = vmatprep.subr.bf16.mxu0 0
    %550 = vmatpush1.bf16.msra.mxu0 0
    %551 = vmatprep.subr.bf16.mxu0 0
    %552 = vmatpush1.bf16.msra.mxu0 0
    %553 = vmatprep.subr.bf16.mxu0 0
    %554 = vmatpush1.bf16.msra.mxu0 0
    %555 = vmatprep.subr.bf16.mxu0 0
    %556 = vmatpush1.bf16.msra.mxu0 0
    %557 = vmatprep.subr.bf16.mxu0 0
    %558 = vmatpush1.bf16.msra.mxu0 0
    %559 = vmatprep.subr.bf16.mxu0 0
    %560 = vmatpush1.bf16.msra.mxu0 0
    %561 = vmatprep.subr.bf16.mxu0 0
    %562 = vmatpush1.bf16.msra.mxu0 %v545
    %563 = vmatprep.subr.bf16.mxu0 0
    %564 = vmatpush2.bf16.msra.mxu0 0
    %565 = vmatprep.subr.bf16.mxu0 0
    %566 = vmatpush2.bf16.msra.mxu0 0
    %567 = vmatprep.subr.bf16.mxu0 0
    %568 = vmatpush2.bf16.msra.mxu0 0
    %569 = vmatprep.subr.bf16.mxu0 0
    %570 = vmatpush2.bf16.msra.mxu0 0
    %571 = vmatprep.subr.bf16.mxu0 0
    %572 = vmatpush2.bf16.msra.mxu0 0
    %573 = vmatprep.subr.bf16.mxu0 0
    %574 = vmatpush2.bf16.msra.mxu0 0
    %575 = vmatprep.subr.bf16.mxu0 0
    %576 = vmatpush2.bf16.msra.mxu0 0
    %577 = vmatprep.subr.bf16.mxu0 0
    %578 = vmatpush2.bf16.msra.mxu0 0
    %579 = vmatprep.mubr.bf16.mxu0 0
    %580 = vmatmul.mubr.bf16.gmra.mxu0 %v542
    %v581 = vpop.f32.mrf.mxu0
    %v582 = vadd.f32 0.0, %v581
    %v583 = vpop.f32.mrf.mxu0
    %v584 = vpop.f32.mrf.mxu0
    %v585 = vpop.f32.mrf.mxu0
    %586 = vdwg.mxu0
    %587 = vrot.lane.b32.xlu0 %v196, 56
    %v588 = vpop.permute.xlu0 %587
    %v590 = vsel %vm200, %v538, 0
    %v593 = vsel %vm321, %v588, 0
    %595 = vmatprep.subr.bf16.mxu0 0
    %596 = vmatpush1.bf16.msra.mxu0 0
    %597 = vmatprep.subr.bf16.mxu0 0
    %598 = vmatpush1.bf16.msra.mxu0 0
    %599 = vmatprep.subr.bf16.mxu0 0
    %600 = vmatpush1.bf16.msra.mxu0 0
    %601 = vmatprep.subr.bf16.mxu0 0
    %602 = vmatpush1.bf16.msra.mxu0 0
    %603 = vmatprep.subr.bf16.mxu0 0
    %604 = vmatpush1.bf16.msra.mxu0 0
    %605 = vmatprep.subr.bf16.mxu0 0
    %606 = vmatpush1.bf16.msra.mxu0 0
    %607 = vmatprep.subr.bf16.mxu0 0
    %608 = vmatpush1.bf16.msra.mxu0 0
    %609 = vmatprep.subr.bf16.mxu0 0
    %610 = vmatpush1.bf16.msra.mxu0 %v593
    %611 = vmatprep.subr.bf16.mxu0 0
    %612 = vmatpush2.bf16.msra.mxu0 0
    %613 = vmatprep.subr.bf16.mxu0 0
    %614 = vmatpush2.bf16.msra.mxu0 0
    %615 = vmatprep.subr.bf16.mxu0 0
    %616 = vmatpush2.bf16.msra.mxu0 0
    %617 = vmatprep.subr.bf16.mxu0 0
    %618 = vmatpush2.bf16.msra.mxu0 0
    %619 = vmatprep.subr.bf16.mxu0 0
    %620 = vmatpush2.bf16.msra.mxu0 0
    %621 = vmatprep.subr.bf16.mxu0 0
    %622 = vmatpush2.bf16.msra.mxu0 0
    %623 = vmatprep.subr.bf16.mxu0 0
    %624 = vmatpush2.bf16.msra.mxu0 0
    %625 = vmatprep.subr.bf16.mxu0 0
    %626 = vmatpush2.bf16.msra.mxu0 0
    %627 = vmatprep.mubr.bf16.mxu0 0
    %628 = vmatmul.mubr.bf16.gmra.mxu0 %v590
    %v629 = vpop.f32.mrf.mxu0
    %v630 = vadd.f32 0.0, %v629
    %v631 = vpop.f32.mrf.mxu0
    %v632 = vpop.f32.mrf.mxu0
    %v633 = vpop.f32.mrf.mxu0
    %634 = vdwg.mxu0
    %v635 = vrcp.pop %v533
    %v636 = vrcp.pop %v536
    %v637 = vmul.f32 %v582, %v635
    %v638 = vmul.f32 %v630, %v636
    %641 = vrot.lane.b32.xlu0 %v637, 8
    %v642 = vpop.permute.xlu0 %641
    %643 = vrot.lane.b32.xlu0 %v638, 8
    %v644 = vpop.permute.xlu0 %643
    %vm647 = vcmask 130112
    %648 = vst.msk [vmem:[#allocation2] sm:$0xff] %vm647, %v642
    %649 = vst.msk [vmem:[#allocation2 + $0x8] sm:$0xff] %vm647, %v644
    %650 = vrot.lane.b32.xlu0 %v195, 112
    %v651 = vpop.permute.xlu0 %650
    %652 = vrot.lane.b32.xlu0 %v195, 80
    %v653 = vpop.permute.xlu0 %652
    %v655 = vsel %vm200, %v651, 0
    %v658 = vsel %vm200, %v653, 0
    %660 = vmatprep.subr.bf16.mxu0 0
    %661 = vmatpush1.bf16.xpose.msra.mxu0 0
    %662 = vmatprep.subr.bf16.mxu0 0
    %663 = vmatpush1.bf16.xpose.msra.mxu0 0
    %664 = vmatprep.subr.bf16.mxu0 0
    %665 = vmatpush1.bf16.xpose.msra.mxu0 0
    %666 = vmatprep.subr.bf16.mxu0 0
    %667 = vmatpush1.bf16.xpose.msra.mxu0 0
    %668 = vmatprep.subr.bf16.mxu0 0
    %669 = vmatpush1.bf16.xpose.msra.mxu0 0
    %670 = vmatprep.subr.bf16.mxu0 0
    %671 = vmatpush1.bf16.xpose.msra.mxu0 0
    %672 = vmatprep.subr.bf16.mxu0 0
    %673 = vmatpush1.bf16.xpose.msra.mxu0 0
    %674 = vmatprep.subr.bf16.mxu0 0
    %675 = vmatpush1.bf16.xpose.msra.mxu0 %v658
    %676 = vmatprep.subr.bf16.mxu0 0
    %677 = vmatpush2.bf16.xpose.msra.mxu0 0
    %678 = vmatprep.subr.bf16.mxu0 0
    %679 = vmatpush2.bf16.xpose.msra.mxu0 0
    %680 = vmatprep.subr.bf16.mxu0 0
    %681 = vmatpush2.bf16.xpose.msra.mxu0 0
    %682 = vmatprep.subr.bf16.mxu0 0
    %683 = vmatpush2.bf16.xpose.msra.mxu0 0
    %684 = vmatprep.subr.bf16.mxu0 0
    %685 = vmatpush2.bf16.xpose.msra.mxu0 0
    %686 = vmatprep.subr.bf16.mxu0 0
    %687 = vmatpush2.bf16.xpose.msra.mxu0 0
    %688 = vmatprep.subr.bf16.mxu0 0
    %689 = vmatpush2.bf16.xpose.msra.mxu0 0
    %690 = vmatprep.subr.bf16.mxu0 0
    %691 = vmatpush2.bf16.xpose.msra.mxu0 0
    %692 = vmatprep.mubr.bf16.mxu0 0
    %693 = vmatmul.mubr.bf16.gmra.mxu0 %v655
    %v694 = vpop.f32.mrf.mxu0
    %v695 = vadd.f32 %v194, %v694
    %v696 = vpop.f32.mrf.mxu0
    %v697 = vpop.f32.mrf.mxu0
    %v698 = vpop.f32.mrf.mxu0
    %699 = vdwg.mxu0
    %700 = vrot.lane.b32.xlu0 %v196, 112
    %v701 = vpop.permute.xlu0 %700
    %702 = vrot.lane.b32.xlu0 %v196, 80
    %v703 = vpop.permute.xlu0 %702
    %v705 = vsel %vm200, %v701, 0
    %v708 = vsel %vm200, %v703, 0
    %710 = vmatprep.subr.bf16.mxu0 0
    %711 = vmatpush1.bf16.xpose.msra.mxu0 0
    %712 = vmatprep.subr.bf16.mxu0 0
    %713 = vmatpush1.bf16.xpose.msra.mxu0 0
    %714 = vmatprep.subr.bf16.mxu0 0
    %715 = vmatpush1.bf16.xpose.msra.mxu0 0
    %716 = vmatprep.subr.bf16.mxu0 0
    %717 = vmatpush1.bf16.xpose.msra.mxu0 0
    %718 = vmatprep.subr.bf16.mxu0 0
    %719 = vmatpush1.bf16.xpose.msra.mxu0 0
    %720 = vmatprep.subr.bf16.mxu0 0
    %721 = vmatpush1.bf16.xpose.msra.mxu0 0
    %722 = vmatprep.subr.bf16.mxu0 0
    %723 = vmatpush1.bf16.xpose.msra.mxu0 0
    %724 = vmatprep.subr.bf16.mxu0 0
    %725 = vmatpush1.bf16.xpose.msra.mxu0 %v708
    %726 = vmatprep.subr.bf16.mxu0 0
    %727 = vmatpush2.bf16.xpose.msra.mxu0 0
    %728 = vmatprep.subr.bf16.mxu0 0
    %729 = vmatpush2.bf16.xpose.msra.mxu0 0
    %730 = vmatprep.subr.bf16.mxu0 0
    %731 = vmatpush2.bf16.xpose.msra.mxu0 0
    %732 = vmatprep.subr.bf16.mxu0 0
    %733 = vmatpush2.bf16.xpose.msra.mxu0 0
    %734 = vmatprep.subr.bf16.mxu0 0
    %735 = vmatpush2.bf16.xpose.msra.mxu0 0
    %736 = vmatprep.subr.bf16.mxu0 0
    %737 = vmatpush2.bf16.xpose.msra.mxu0 0
    %738 = vmatprep.subr.bf16.mxu0 0
    %739 = vmatpush2.bf16.xpose.msra.mxu0 0
    %740 = vmatprep.subr.bf16.mxu0 0
    %741 = vmatpush2.bf16.xpose.msra.mxu0 0
    %742 = vmatprep.mubr.bf16.mxu0 0
    %743 = vmatmul.mubr.bf16.gmra.mxu0 %v705
    %v744 = vpop.f32.mrf.mxu0
    %v745 = vadd.f32 %v194, %v744
    %v746 = vpop.f32.mrf.mxu0
    %v747 = vpop.f32.mrf.mxu0
    %v748 = vpop.f32.mrf.mxu0
    %749 = vdwg.mxu0
    %v750 = vsel %vm200, %v695, -inf
    %751 = vmax.xlane.f32.xlu0 %v750
    %v752 = vpop.xlane.xlu0 %751
    %v753 = vsel %vm200, %v745, -inf
    %754 = vmax.xlane.f32.xlu0 %v753
    %v755 = vpop.xlane.xlu0 %754
    %v756 = vsub.f32 %v695, %v752
    %v757 = vsub.f32 %v745, %v755
    %v758 = vmul.f32 %v756, 1.442695
    %v759 = vpow.pop %v758
    %v760 = vmul.f32 %v757, 1.442695
    %v761 = vpow.pop %v760
    %v762 = vsel %vm200, %v759, 0.0
    %763 = vadd.xlane.f32.xlu0 %v762
    %v764 = vpop.xlane.xlu0 %763
    %v765 = vsel %vm200, %v761, 0.0
    %766 = vadd.xlane.f32.xlu0 %v765
    %v767 = vpop.xlane.xlu0 %766
    %v768 = vpack.c.bf16 %v759, %v759
    %v769 = vpack.c.bf16 %v761, %v761
    %770 = vrot.lane.b32.xlu0 %v195, 48
    %v771 = vpop.permute.xlu0 %770
    %v773 = vsel %vm200, %v768, 0
    %v776 = vsel %vm321, %v771, 0
    %778 = vmatprep.subr.bf16.mxu0 0
    %779 = vmatpush1.bf16.msra.mxu0 0
    %780 = vmatprep.subr.bf16.mxu0 0
    %781 = vmatpush1.bf16.msra.mxu0 0
    %782 = vmatprep.subr.bf16.mxu0 0
    %783 = vmatpush1.bf16.msra.mxu0 0
    %784 = vmatprep.subr.bf16.mxu0 0
    %785 = vmatpush1.bf16.msra.mxu0 0
    %786 = vmatprep.subr.bf16.mxu0 0
    %787 = vmatpush1.bf16.msra.mxu0 0
    %788 = vmatprep.subr.bf16.mxu0 0
    %789 = vmatpush1.bf16.msra.mxu0 0
    %790 = vmatprep.subr.bf16.mxu0 0
    %791 = vmatpush1.bf16.msra.mxu0 0
    %792 = vmatprep.subr.bf16.mxu0 0
    %793 = vmatpush1.bf16.msra.mxu0 %v776
    %794 = vmatprep.subr.bf16.mxu0 0
    %795 = vmatpush2.bf16.msra.mxu0 0
    %796 = vmatprep.subr.bf16.mxu0 0
    %797 = vmatpush2.bf16.msra.mxu0 0
    %798 = vmatprep.subr.bf16.mxu0 0
    %799 = vmatpush2.bf16.msra.mxu0 0
    %800 = vmatprep.subr.bf16.mxu0 0
    %801 = vmatpush2.bf16.msra.mxu0 0
    %802 = vmatprep.subr.bf16.mxu0 0
    %803 = vmatpush2.bf16.msra.mxu0 0
    %804 = vmatprep.subr.bf16.mxu0 0
    %805 = vmatpush2.bf16.msra.mxu0 0
    %806 = vmatprep.subr.bf16.mxu0 0
    %807 = vmatpush2.bf16.msra.mxu0 0
    %808 = vmatprep.subr.bf16.mxu0 0
    %809 = vmatpush2.bf16.msra.mxu0 0
    %810 = vmatprep.mubr.bf16.mxu0 0
    %811 = vmatmul.mubr.bf16.gmra.mxu0 %v773
    %v812 = vpop.f32.mrf.mxu0
    %v813 = vadd.f32 0.0, %v812
    %v814 = vpop.f32.mrf.mxu0
    %v815 = vpop.f32.mrf.mxu0
    %v816 = vpop.f32.mrf.mxu0
    %817 = vdwg.mxu0
    %818 = vrot.lane.b32.xlu0 %v196, 48
    %v819 = vpop.permute.xlu0 %818
    %v821 = vsel %vm200, %v769, 0
    %v824 = vsel %vm321, %v819, 0
    %826 = vmatprep.subr.bf16.mxu0 0
    %827 = vmatpush1.bf16.msra.mxu0 0
    %828 = vmatprep.subr.bf16.mxu0 0
    %829 = vmatpush1.bf16.msra.mxu0 0
    %830 = vmatprep.subr.bf16.mxu0 0
    %831 = vmatpush1.bf16.msra.mxu0 0
    %832 = vmatprep.subr.bf16.mxu0 0
    %833 = vmatpush1.bf16.msra.mxu0 0
    %834 = vmatprep.subr.bf16.mxu0 0
    %835 = vmatpush1.bf16.msra.mxu0 0
    %836 = vmatprep.subr.bf16.mxu0 0
    %837 = vmatpush1.bf16.msra.mxu0 0
    %838 = vmatprep.subr.bf16.mxu0 0
    %839 = vmatpush1.bf16.msra.mxu0 0
    %840 = vmatprep.subr.bf16.mxu0 0
    %841 = vmatpush1.bf16.msra.mxu0 %v824
    %842 = vmatprep.subr.bf16.mxu0 0
    %843 = vmatpush2.bf16.msra.mxu0 0
    %844 = vmatprep.subr.bf16.mxu0 0
    %845 = vmatpush2.bf16.msra.mxu0 0
    %846 = vmatprep.subr.bf16.mxu0 0
    %847 = vmatpush2.bf16.msra.mxu0 0
    %848 = vmatprep.subr.bf16.mxu0 0
    %849 = vmatpush2.bf16.msra.mxu0 0
    %850 = vmatprep.subr.bf16.mxu0 0
    %851 = vmatpush2.bf16.msra.mxu0 0
    %852 = vmatprep.subr.bf16.mxu0 0
    %853 = vmatpush2.bf16.msra.mxu0 0
    %854 = vmatprep.subr.bf16.mxu0 0
    %855 = vmatpush2.bf16.msra.mxu0 0
    %856 = vmatprep.subr.bf16.mxu0 0
    %857 = vmatpush2.bf16.msra.mxu0 0
    %858 = vmatprep.mubr.bf16.mxu0 0
    %859 = vmatmul.mubr.bf16.gmra.mxu0 %v821
    %v860 = vpop.f32.mrf.mxu0
    %v861 = vadd.f32 0.0, %v860
    %v862 = vpop.f32.mrf.mxu0
    %v863 = vpop.f32.mrf.mxu0
    %v864 = vpop.f32.mrf.mxu0
    %865 = vdwg.mxu0
    %v866 = vrcp.pop %v764
    %v867 = vrcp.pop %v767
    %v868 = vmul.f32 %v813, %v866
    %v869 = vmul.f32 %v861, %v867
    %872 = vrot.lane.b32.xlu0 %v868, 16
    %v873 = vpop.permute.xlu0 %872
    %874 = vrot.lane.b32.xlu0 %v869, 16
    %v875 = vpop.permute.xlu0 %874
    %vm878 = vcmask 195712
    %879 = vst.msk [vmem:[#allocation2] sm:$0xff] %vm878, %v873
    %880 = vst.msk [vmem:[#allocation2 + $0x8] sm:$0xff] %vm878, %v875
    %881 = vrot.lane.b32.xlu0 %v195, 104
    %v882 = vpop.permute.xlu0 %881
    %883 = vrot.lane.b32.xlu0 %v195, 72
    %v884 = vpop.permute.xlu0 %883
    %v886 = vsel %vm200, %v882, 0
    %v889 = vsel %vm200, %v884, 0
    %891 = vmatprep.subr.bf16.mxu0 0
    %892 = vmatpush1.bf16.xpose.msra.mxu0 0
    %893 = vmatprep.subr.bf16.mxu0 0
    %894 = vmatpush1.bf16.xpose.msra.mxu0 0
    %895 = vmatprep.subr.bf16.mxu0 0
    %896 = vmatpush1.bf16.xpose.msra.mxu0 0
    %897 = vmatprep.subr.bf16.mxu0 0
    %898 = vmatpush1.bf16.xpose.msra.mxu0 0
    %899 = vmatprep.subr.bf16.mxu0 0
    %900 = vmatpush1.bf16.xpose.msra.mxu0 0
    %901 = vmatprep.subr.bf16.mxu0 0
    %902 = vmatpush1.bf16.xpose.msra.mxu0 0
    %903 = vmatprep.subr.bf16.mxu0 0
    %904 = vmatpush1.bf16.xpose.msra.mxu0 0
    %905 = vmatprep.subr.bf16.mxu0 0
    %906 = vmatpush1.bf16.xpose.msra.mxu0 %v889
    %907 = vmatprep.subr.bf16.mxu0 0
    %908 = vmatpush2.bf16.xpose.msra.mxu0 0
    %909 = vmatprep.subr.bf16.mxu0 0
    %910 = vmatpush2.bf16.xpose.msra.mxu0 0
    %911 = vmatprep.subr.bf16.mxu0 0
    %912 = vmatpush2.bf16.xpose.msra.mxu0 0
    %913 = vmatprep.subr.bf16.mxu0 0
    %914 = vmatpush2.bf16.xpose.msra.mxu0 0
    %915 = vmatprep.subr.bf16.mxu0 0
    %916 = vmatpush2.bf16.xpose.msra.mxu0 0
    %917 = vmatprep.subr.bf16.mxu0 0
    %918 = vmatpush2.bf16.xpose.msra.mxu0 0
    %919 = vmatprep.subr.bf16.mxu0 0
    %920 = vmatpush2.bf16.xpose.msra.mxu0 0
    %921 = vmatprep.subr.bf16.mxu0 0
    %922 = vmatpush2.bf16.xpose.msra.mxu0 0
    %923 = vmatprep.mubr.bf16.mxu0 0
    %924 = vmatmul.mubr.bf16.gmra.mxu0 %v886
    %v925 = vpop.f32.mrf.mxu0
    %v926 = vadd.f32 %v194, %v925
    %v927 = vpop.f32.mrf.mxu0
    %v928 = vpop.f32.mrf.mxu0
    %v929 = vpop.f32.mrf.mxu0
    %930 = vdwg.mxu0
    %931 = vrot.lane.b32.xlu0 %v196, 104
    %v932 = vpop.permute.xlu0 %931
    %933 = vrot.lane.b32.xlu0 %v196, 72
    %v934 = vpop.permute.xlu0 %933
    %v936 = vsel %vm200, %v932, 0
    %v939 = vsel %vm200, %v934, 0
    %941 = vmatprep.subr.bf16.mxu0 0
    %942 = vmatpush1.bf16.xpose.msra.mxu0 0
    %943 = vmatprep.subr.bf16.mxu0 0
    %944 = vmatpush1.bf16.xpose.msra.mxu0 0
    %945 = vmatprep.subr.bf16.mxu0 0
    %946 = vmatpush1.bf16.xpose.msra.mxu0 0
    %947 = vmatprep.subr.bf16.mxu0 0
    %948 = vmatpush1.bf16.xpose.msra.mxu0 0
    %949 = vmatprep.subr.bf16.mxu0 0
    %950 = vmatpush1.bf16.xpose.msra.mxu0 0
    %951 = vmatprep.subr.bf16.mxu0 0
    %952 = vmatpush1.bf16.xpose.msra.mxu0 0
    %953 = vmatprep.subr.bf16.mxu0 0
    %954 = vmatpush1.bf16.xpose.msra.mxu0 0
    %955 = vmatprep.subr.bf16.mxu0 0
    %956 = vmatpush1.bf16.xpose.msra.mxu0 %v939
    %957 = vmatprep.subr.bf16.mxu0 0
    %958 = vmatpush2.bf16.xpose.msra.mxu0 0
    %959 = vmatprep.subr.bf16.mxu0 0
    %960 = vmatpush2.bf16.xpose.msra.mxu0 0
    %961 = vmatprep.subr.bf16.mxu0 0
    %962 = vmatpush2.bf16.xpose.msra.mxu0 0
    %963 = vmatprep.subr.bf16.mxu0 0
    %964 = vmatpush2.bf16.xpose.msra.mxu0 0
    %965 = vmatprep.subr.bf16.mxu0 0
    %966 = vmatpush2.bf16.xpose.msra.mxu0 0
    %967 = vmatprep.subr.bf16.mxu0 0
    %968 = vmatpush2.bf16.xpose.msra.mxu0 0
    %969 = vmatprep.subr.bf16.mxu0 0
    %970 = vmatpush2.bf16.xpose.msra.mxu0 0
    %971 = vmatprep.subr.bf16.mxu0 0
    %972 = vmatpush2.bf16.xpose.msra.mxu0 0
    %973 = vmatprep.mubr.bf16.mxu0 0
    %974 = vmatmul.mubr.bf16.gmra.mxu0 %v936
    %v975 = vpop.f32.mrf.mxu0
    %v976 = vadd.f32 %v194, %v975
    %v977 = vpop.f32.mrf.mxu0
    %v978 = vpop.f32.mrf.mxu0
    %v979 = vpop.f32.mrf.mxu0
    %980 = vdwg.mxu0
    %v981 = vsel %vm200, %v926, -inf
    %982 = vmax.xlane.f32.xlu0 %v981
    %v983 = vpop.xlane.xlu0 %982
    %v984 = vsel %vm200, %v976, -inf
    %985 = vmax.xlane.f32.xlu0 %v984
    %v986 = vpop.xlane.xlu0 %985
    %v987 = vsub.f32 %v926, %v983
    %v988 = vsub.f32 %v976, %v986
    %v989 = vmul.f32 %v987, 1.442695
    %v990 = vpow.pop %v989
    %v991 = vmul.f32 %v988, 1.442695
    %v992 = vpow.pop %v991
    %v993 = vsel %vm200, %v990, 0.0
    %994 = vadd.xlane.f32.xlu0 %v993
    %v995 = vpop.xlane.xlu0 %994
    %v996 = vsel %vm200, %v992, 0.0
    %997 = vadd.xlane.f32.xlu0 %v996
    %v998 = vpop.xlane.xlu0 %997
    %v999 = vpack.c.bf16 %v990, %v990
    %v1000 = vpack.c.bf16 %v992, %v992
    %1001 = vrot.lane.b32.xlu0 %v195, 40
    %v1002 = vpop.permute.xlu0 %1001
    %v1004 = vsel %vm200, %v999, 0
    %v1007 = vsel %vm321, %v1002, 0
    %1009 = vmatprep.subr.bf16.mxu0 0
    %1010 = vmatpush1.bf16.msra.mxu0 0
    %1011 = vmatprep.subr.bf16.mxu0 0
    %1012 = vmatpush1.bf16.msra.mxu0 0
    %1013 = vmatprep.subr.bf16.mxu0 0
    %1014 = vmatpush1.bf16.msra.mxu0 0
    %1015 = vmatprep.subr.bf16.mxu0 0
    %1016 = vmatpush1.bf16.msra.mxu0 0
    %1017 = vmatprep.subr.bf16.mxu0 0
    %1018 = vmatpush1.bf16.msra.mxu0 0
    %1019 = vmatprep.subr.bf16.mxu0 0
    %1020 = vmatpush1.bf16.msra.mxu0 0
    %1021 = vmatprep.subr.bf16.mxu0 0
    %1022 = vmatpush1.bf16.msra.mxu0 0
    %1023 = vmatprep.subr.bf16.mxu0 0
    %1024 = vmatpush1.bf16.msra.mxu0 %v1007
    %1025 = vmatprep.subr.bf16.mxu0 0
    %1026 = vmatpush2.bf16.msra.mxu0 0
    %1027 = vmatprep.subr.bf16.mxu0 0
    %1028 = vmatpush2.bf16.msra.mxu0 0
    %1029 = vmatprep.subr.bf16.mxu0 0
    %1030 = vmatpush2.bf16.msra.mxu0 0
    %1031 = vmatprep.subr.bf16.mxu0 0
    %1032 = vmatpush2.bf16.msra.mxu0 0
    %1033 = vmatprep.subr.bf16.mxu0 0
    %1034 = vmatpush2.bf16.msra.mxu0 0
    %1035 = vmatprep.subr.bf16.mxu0 0
    %1036 = vmatpush2.bf16.msra.mxu0 0
    %1037 = vmatprep.subr.bf16.mxu0 0
    %1038 = vmatpush2.bf16.msra.mxu0 0
    %1039 = vmatprep.subr.bf16.mxu0 0
    %1040 = vmatpush2.bf16.msra.mxu0 0
    %1041 = vmatprep.mubr.bf16.mxu0 0
    %1042 = vmatmul.mubr.bf16.gmra.mxu0 %v1004
    %v1043 = vpop.f32.mrf.mxu0
    %v1044 = vadd.f32 0.0, %v1043
    %v1045 = vpop.f32.mrf.mxu0
    %v1046 = vpop.f32.mrf.mxu0
    %v1047 = vpop.f32.mrf.mxu0
    %1048 = vdwg.mxu0
    %1049 = vrot.lane.b32.xlu0 %v196, 40
    %v1050 = vpop.permute.xlu0 %1049
    %v1052 = vsel %vm200, %v1000, 0
    %v1055 = vsel %vm321, %v1050, 0
    %1057 = vmatprep.subr.bf16.mxu0 0
    %1058 = vmatpush1.bf16.msra.mxu0 0
    %1059 = vmatprep.subr.bf16.mxu0 0
    %1060 = vmatpush1.bf16.msra.mxu0 0
    %1061 = vmatprep.subr.bf16.mxu0 0
    %1062 = vmatpush1.bf16.msra.mxu0 0
    %1063 = vmatprep.subr.bf16.mxu0 0
    %1064 = vmatpush1.bf16.msra.mxu0 0
    %1065 = vmatprep.subr.bf16.mxu0 0
    %1066 = vmatpush1.bf16.msra.mxu0 0
    %1067 = vmatprep.subr.bf16.mxu0 0
    %1068 = vmatpush1.bf16.msra.mxu0 0
    %1069 = vmatprep.subr.bf16.mxu0 0
    %1070 = vmatpush1.bf16.msra.mxu0 0
    %1071 = vmatprep.subr.bf16.mxu0 0
    %1072 = vmatpush1.bf16.msra.mxu0 %v1055
    %1073 = vmatprep.subr.bf16.mxu0 0
    %1074 = vmatpush2.bf16.msra.mxu0 0
    %1075 = vmatprep.subr.bf16.mxu0 0
    %1076 = vmatpush2.bf16.msra.mxu0 0
    %1077 = vmatprep.subr.bf16.mxu0 0
    %1078 = vmatpush2.bf16.msra.mxu0 0
    %1079 = vmatprep.subr.bf16.mxu0 0
    %1080 = vmatpush2.bf16.msra.mxu0 0
    %1081 = vmatprep.subr.bf16.mxu0 0
    %1082 = vmatpush2.bf16.msra.mxu0 0
    %1083 = vmatprep.subr.bf16.mxu0 0
    %1084 = vmatpush2.bf16.msra.mxu0 0
    %1085 = vmatprep.subr.bf16.mxu0 0
    %1086 = vmatpush2.bf16.msra.mxu0 0
    %1087 = vmatprep.subr.bf16.mxu0 0
    %1088 = vmatpush2.bf16.msra.mxu0 0
    %1089 = vmatprep.mubr.bf16.mxu0 0
    %1090 = vmatmul.mubr.bf16.gmra.mxu0 %v1052
    %v1091 = vpop.f32.mrf.mxu0
    %v1092 = vadd.f32 0.0, %v1091
    %v1093 = vpop.f32.mrf.mxu0
    %v1094 = vpop.f32.mrf.mxu0
    %v1095 = vpop.f32.mrf.mxu0
    %1096 = vdwg.mxu0
    %v1097 = vrcp.pop %v995
    %v1098 = vrcp.pop %v998
    %v1099 = vmul.f32 %v1044, %v1097
    %v1100 = vmul.f32 %v1092, %v1098
    %1103 = vrot.lane.b32.xlu0 %v1099, 24
    %v1104 = vpop.permute.xlu0 %1103
    %1105 = vrot.lane.b32.xlu0 %v1100, 24
    %v1106 = vpop.permute.xlu0 %1105
    %vm1109 = vcmask 261312
    %1110 = vst.msk [vmem:[#allocation2] sm:$0xff] %vm1109, %v1104
    %1111 = vst.msk [vmem:[#allocation2 + $0x8] sm:$0xff] %vm1109, %v1106
    %v1112 = vld [vmem:[#allocation2] sm:$0xff]
    %v1113 = vld [vmem:[#allocation2 + $0x8] sm:$0xff]
    %v1114 = vpack.c.bf16 %v1113, %v1112
    %v1115 = vld [vmem:[%s3] sm:$0xf]
    %v1116 = vld [vmem:[%s3 + $0x4] sm:$0xf]
    %v1117 = vld [vmem:[%s3 + $0x8] sm:$0xf]
    %v1118 = vld [vmem:[%s3 + $0xc] sm:$0xf]
    %v1119 = vld [vmem:[#allocation6] sm:$0x1]
    %v1121 = vlaneseq
    %v1122 = vshrl.u32 %v1121, 7
    %v1123 = vsub.s32 0, %v1122
    %v1124 = vrot.slane %v1119, %v1123
    %v1130 = vunpack.c.l.b16 %v1115
    %v1131 = vunpack.c.l.b16 %v1116
    %v1132 = vunpack.c.l.b16 %v1117
    %v1133 = vunpack.c.l.b16 %v1118
    %v1134 = vpack.c.b16 %v1131, %v1130
    %v1135 = vpack.c.b16 %v1133, %v1132
    %v1139 = vsel %vm144, %v1114, 0
    %1141 = vmatprep.subr.bf16.mxu0 0
    %1142 = vmatpush1.bf16.msra.mxu0 0
    %1143 = vmatprep.subr.bf16.mxu0 0
    %1144 = vmatpush1.bf16.msra.mxu0 0
    %1145 = vmatprep.subr.bf16.mxu0 0
    %1146 = vmatpush1.bf16.msra.mxu0 0
    %1147 = vmatprep.subr.bf16.mxu0 0
    %1148 = vmatpush1.bf16.msra.mxu0 0
    %1149 = vmatprep.subr.bf16.mxu0 0
    %1150 = vmatpush1.bf16.msra.mxu0 0
    %1151 = vmatprep.subr.bf16.mxu0 0
    %1152 = vmatpush1.bf16.msra.mxu0 0
    %1153 = vmatprep.subr.bf16.mxu0 0
    %1154 = vmatpush1.bf16.msra.mxu0 %v1135
    %1155 = vmatprep.subr.bf16.mxu0 0
    %1156 = vmatpush1.bf16.msra.mxu0 %v1134
    %1157 = vmatprep.subr.bf16.mxu0 0
    %1158 = vmatpush2.bf16.msra.mxu0 0
    %1159 = vmatprep.subr.bf16.mxu0 0
    %1160 = vmatpush2.bf16.msra.mxu0 0
    %1161 = vmatprep.subr.bf16.mxu0 0
    %1162 = vmatpush2.bf16.msra.mxu0 0
    %1163 = vmatprep.subr.bf16.mxu0 0
    %1164 = vmatpush2.bf16.msra.mxu0 0
    %1165 = vmatprep.subr.bf16.mxu0 0
    %1166 = vmatpush2.bf16.msra.mxu0 0
    %1167 = vmatprep.subr.bf16.mxu0 0
    %1168 = vmatpush2.bf16.msra.mxu0 0
    %1169 = vmatprep.subr.bf16.mxu0 0
    %1170 = vmatpush2.bf16.msra.mxu0 0
    %1171 = vmatprep.subr.bf16.mxu0 0
    %1172 = vmatpush2.bf16.msra.mxu0 0
    %1173 = vmatprep.mubr.bf16.mxu0 0
    %1174 = vmatmul.mubr.bf16.gmra.mxu0 %v1139
    %v1175 = vpop.f32.mrf.mxu0
    %v1176 = vadd.f32 %v1124, %v1175
    %v1177 = vpop.f32.mrf.mxu0
    %v1178 = vpop.f32.mrf.mxu0
    %v1179 = vadd.f32 %v1124, %v1178
    %v1180 = vpop.f32.mrf.mxu0
    %1181 = vdwg.mxu0
    %v1182 = vadd.f32 %v118, %v1176
    %v1183 = vadd.f32 %v119, %v1179
    %v1184 = vld [vmem:[#allocation8] sm:$0x1]
    %v1185 = vld [vmem:[#allocation9] sm:$0x1]
    %v1186 = vsel %vm144, %v1182, 0.0
    %1187 = vadd.xlane.f32.xlu0 %v1186
    %v1188 = vpop.xlane.xlu0 %1187
    %v1189 = vsel %vm144, %v1183, 0.0
    %1190 = vadd.xlane.f32.xlu0 %v1189
    %v1191 = vpop.xlane.xlu0 %1190
    %v1192 = vrcp.pop 32.0
    %v1193 = vmul.f32 %v1188, %v1192
    %v1194 = vmul.f32 %v1191, %v1192
    %v1195 = vsub.f32 %v1182, %v1193
    %v1196 = vsub.f32 %v1183, %v1194
    %v1197 = vmul.f32 %v1195, %v1195
    %v1198 = vmul.f32 %v1196, %v1196
    %v1199 = vsel %vm144, %v1197, 0.0
    %1200 = vadd.xlane.f32.xlu0 %v1199
    %v1201 = vpop.xlane.xlu0 %1200
    %v1202 = vsel %vm144, %v1198, 0.0
    %1203 = vadd.xlane.f32.xlu0 %v1202
    %v1204 = vpop.xlane.xlu0 %1203
    %v1205 = vmul.f32 %v1201, %v1192
    %v1206 = vmul.f32 %v1204, %v1192
    %v1207 = vadd.f32 %v1205, 1e-05
    %v1208 = vadd.f32 %v1206, 1e-05
    %v1209 = vrsqrt.pop %v1207
    %v1210 = vrsqrt.pop %v1208
    %v1211 = vmul.f32 %v1195, %v1209
    %v1212 = vmul.f32 %v1196, %v1210
    %v1214 = vlaneseq
    %v1215 = vshrl.u32 %v1214, 7
    %v1216 = vsub.s32 0, %v1215
    %v1217 = vrot.slane %v1184, %v1216
    %v1219 = vmul.f32 %v1211, %v1217
    %v1220 = vmul.f32 %v1212, %v1217
    %v1222 = vlaneseq
    %v1223 = vshrl.u32 %v1222, 7
    %v1224 = vsub.s32 0, %v1223
    %v1225 = vrot.slane %v1185, %v1224
    %v1227 = vadd.f32 %v1219, %v1225
    %v1228 = vadd.f32 %v1220, %v1225
    %v1229 = vpack.c.bf16 %v1228, %v1227
    %v1230 = vld [vmem:[#allocation11] sm:$0xf]
    %v1231 = vld [vmem:[#allocation11 + $0x4] sm:$0xf]
    %v1232 = vld [vmem:[#allocation11 + $0x8] sm:$0xf]
    %v1233 = vld [vmem:[#allocation11 + $0xc] sm:$0xf]
    %v1234 = vld [vmem:[#allocation12] sm:$0x1]
    %v1236 = vlaneseq
    %v1237 = vshrl.u32 %v1236, 7
    %v1238 = vsub.s32 0, %v1237
    %v1239 = vrot.slane %v1234, %v1238
    %v1245 = vunpack.c.l.b16 %v1230
    %v1246 = vunpack.c.l.b16 %v1231
    %v1247 = vunpack.c.l.b16 %v1232
    %v1248 = vunpack.c.l.b16 %v1233
    %v1249 = vpack.c.b16 %v1246, %v1245
    %v1250 = vpack.c.b16 %v1248, %v1247
    %v1254 = vsel %vm144, %v1229, 0
    %1256 = vmatprep.subr.bf16.mxu0 0
    %1257 = vmatpush1.bf16.msra.mxu0 0
    %1258 = vmatprep.subr.bf16.mxu0 0
    %1259 = vmatpush1.bf16.msra.mxu0 0
    %1260 = vmatprep.subr.bf16.mxu0 0
    %1261 = vmatpush1.bf16.msra.mxu0 0
    %1262 = vmatprep.subr.bf16.mxu0 0
    %1263 = vmatpush1.bf16.msra.mxu0 0
    %1264 = vmatprep.subr.bf16.mxu0 0
    %1265 = vmatpush1.bf16.msra.mxu0 0
    %1266 = vmatprep.subr.bf16.mxu0 0
    %1267 = vmatpush1.bf16.msra.mxu0 0
    %1268 = vmatprep.subr.bf16.mxu0 0
    %1269 = vmatpush1.bf16.msra.mxu0 %v1250
    %1270 = vmatprep.subr.bf16.mxu0 0
    %1271 = vmatpush1.bf16.msra.mxu0 %v1249
    %1272 = vmatprep.subr.bf16.mxu0 0
    %1273 = vmatpush2.bf16.msra.mxu0 0
    %1274 = vmatprep.subr.bf16.mxu0 0
    %1275 = vmatpush2.bf16.msra.mxu0 0
    %1276 = vmatprep.subr.bf16.mxu0 0
    %1277 = vmatpush2.bf16.msra.mxu0 0
    %1278 = vmatprep.subr.bf16.mxu0 0
    %1279 = vmatpush2.bf16.msra.mxu0 0
    %1280 = vmatprep.subr.bf16.mxu0 0
    %1281 = vmatpush2.bf16.msra.mxu0 0
    %1282 = vmatprep.subr.bf16.mxu0 0
    %1283 = vmatpush2.bf16.msra.mxu0 0
    %1284 = vmatprep.subr.bf16.mxu0 0
    %1285 = vmatpush2.bf16.msra.mxu0 0
    %1286 = vmatprep.subr.bf16.mxu0 0
    %1287 = vmatpush2.bf16.msra.mxu0 0
    %1288 = vmatprep.mubr.bf16.mxu0 0
    %1289 = vmatmul.mubr.bf16.gmra.mxu0 %v1254
    %v1290 = vpop.f32.mrf.mxu0
    %v1291 = vadd.f32 %v1239, %v1290
    %v1292 = vpop.f32.mrf.mxu0
    %v1293 = vpop.f32.mrf.mxu0
    %v1294 = vadd.f32 %v1239, %v1293
    %v1295 = vpop.f32.mrf.mxu0
    %1296 = vdwg.mxu0
    %v1297 = vmax.f32 %v1291, 0.0
    %v1298 = vmax.f32 %v1294, 0.0
    %v1299 = vpack.c.bf16 %v1298, %v1297
    %v1300 = vld [vmem:[%s9] sm:$0xf]
    %v1301 = vld [vmem:[%s9 + $0x4] sm:$0xf]
    %v1302 = vld [vmem:[%s9 + $0x8] sm:$0xf]
    %v1303 = vld [vmem:[%s9 + $0xc] sm:$0xf]
    %v1304 = vld [vmem:[%s9 + $0x10] sm:$0xf]
    %v1305 = vld [vmem:[%s9 + $0x14] sm:$0xf]
    %v1306 = vld [vmem:[%s9 + $0x18] sm:$0xf]
    %v1307 = vld [vmem:[%s9 + $0x1c] sm:$0xf]
    %v1308 = vld [vmem:[%s10] sm:$0x1]
    %v1310 = vlaneseq
    %v1311 = vshrl.u32 %v1310, 7
    %v1312 = vsub.s32 0, %v1311
    %v1313 = vrot.slane %v1308, %v1312
    %v1323 = vunpack.c.l.b16 %v1300
    %v1324 = vunpack.c.l.b16 %v1301
    %v1325 = vunpack.c.l.b16 %v1302
    %v1326 = vunpack.c.l.b16 %v1303
    %v1327 = vunpack.c.l.b16 %v1304
    %v1328 = vunpack.c.l.b16 %v1305
    %v1329 = vunpack.c.l.b16 %v1306
    %v1330 = vunpack.c.l.b16 %v1307
    %v1331 = vpack.c.b16 %v1324, %v1323
    %v1332 = vpack.c.b16 %v1326, %v1325
    %v1333 = vpack.c.b16 %v1328, %v1327
    %v1334 = vpack.c.b16 %v1330, %v1329
    %vm1339 = vcmask 523264
    %v1341 = vsel %vm1339, %v1299, 0
    %1343 = vmatprep.subr.bf16.mxu0 0
    %1344 = vmatpush1.bf16.msra.mxu0 0
    %1345 = vmatprep.subr.bf16.mxu0 0
    %1346 = vmatpush1.bf16.msra.mxu0 0
    %1347 = vmatprep.subr.bf16.mxu0 0
    %1348 = vmatpush1.bf16.msra.mxu0 0
    %1349 = vmatprep.subr.bf16.mxu0 0
    %1350 = vmatpush1.bf16.msra.mxu0 0
    %1351 = vmatprep.subr.bf16.mxu0 0
    %1352 = vmatpush1.bf16.msra.mxu0 %v1334
    %1353 = vmatprep.subr.bf16.mxu0 0
    %1354 = vmatpush1.bf16.msra.mxu0 %v1333
    %1355 = vmatprep.subr.bf16.mxu0 0
    %1356 = vmatpush1.bf16.msra.mxu0 %v1332
    %1357 = vmatprep.subr.bf16.mxu0 0
    %1358 = vmatpush1.bf16.msra.mxu0 %v1331
    %1359 = vmatprep.subr.bf16.mxu0 0
    %1360 = vmatpush2.bf16.msra.mxu0 0
    %1361 = vmatprep.subr.bf16.mxu0 0
    %1362 = vmatpush2.bf16.msra.mxu0 0
    %1363 = vmatprep.subr.bf16.mxu0 0
    %1364 = vmatpush2.bf16.msra.mxu0 0
    %1365 = vmatprep.subr.bf16.mxu0 0
    %1366 = vmatpush2.bf16.msra.mxu0 0
    %1367 = vmatprep.subr.bf16.mxu0 0
    %1368 = vmatpush2.bf16.msra.mxu0 0
    %1369 = vmatprep.subr.bf16.mxu0 0
    %1370 = vmatpush2.bf16.msra.mxu0 0
    %1371 = vmatprep.subr.bf16.mxu0 0
    %1372 = vmatpush2.bf16.msra.mxu0 0
    %1373 = vmatprep.subr.bf16.mxu0 0
    %1374 = vmatpush2.bf16.msra.mxu0 0
    %1375 = vmatprep.mubr.bf16.mxu0 0
    %1376 = vmatmul.mubr.bf16.gmra.mxu0 %v1341
    %v1377 = vpop.f32.mrf.mxu0
    %v1378 = vadd.f32 %v1313, %v1377
    %v1379 = vpop.f32.mrf.mxu0
    %v1380 = vpop.f32.mrf.mxu0
    %v1381 = vadd.f32 %v1313, %v1380
    %v1382 = vpop.f32.mrf.mxu0
    %1383 = vdwg.mxu0
    %v1384 = vadd.f32 %v1227, %v1378
    %v1385 = vadd.f32 %v1228, %v1381
    %v1386 = vld [vmem:[%s11] sm:$0x1]
    %v1387 = vld [vmem:[%s12] sm:$0x1]
    %v1388 = vsel %vm144, %v1384, 0.0
    %1389 = vadd.xlane.f32.xlu0 %v1388
    %v1390 = vpop.xlane.xlu0 %1389
    %v1391 = vsel %vm144, %v1385, 0.0
    %1392 = vadd.xlane.f32.xlu0 %v1391
    %v1393 = vpop.xlane.xlu0 %1392
    %v1394 = vmul.f32 %v1390, %v1192
    %v1395 = vmul.f32 %v1393, %v1192
    %v1396 = vsub.f32 %v1384, %v1394
    %v1397 = vsub.f32 %v1385, %v1395
    %v1398 = vmul.f32 %v1396, %v1396
    %v1399 = vmul.f32 %v1397, %v1397
    %v1400 = vsel %vm144, %v1398, 0.0
    %1401 = vadd.xlane.f32.xlu0 %v1400
    %v1402 = vpop.xlane.xlu0 %1401
    %v1403 = vsel %vm144, %v1399, 0.0
    %1404 = vadd.xlane.f32.xlu0 %v1403
    %v1405 = vpop.xlane.xlu0 %1404
    %v1406 = vmul.f32 %v1402, %v1192
    %v1407 = vmul.f32 %v1405, %v1192
    %v1408 = vadd.f32 %v1406, 1e-05
    %v1409 = vadd.f32 %v1407, 1e-05
    %v1410 = vrsqrt.pop %v1408
    %v1411 = vrsqrt.pop %v1409
    %v1412 = vmul.f32 %v1396, %v1410
    %v1413 = vmul.f32 %v1397, %v1411
    %v1415 = vlaneseq
    %v1416 = vshrl.u32 %v1415, 7
    %v1417 = vsub.s32 0, %v1416
    %v1418 = vrot.slane %v1386, %v1417
    %v1420 = vmul.f32 %v1412, %v1418
    %v1421 = vmul.f32 %v1413, %v1418
    %v1423 = vlaneseq
    %v1424 = vshrl.u32 %v1423, 7
    %v1425 = vsub.s32 0, %v1424
    %v1426 = vrot.slane %v1387, %v1425
    %v1428 = vadd.f32 %v1420, %v1426
    %v1429 = vadd.f32 %v1421, %v1426
    %1430 = vst.msk [vmem:[#allocation14] sm:$0xff] %vm144, %v1428
    %1431 = vst.msk [vmem:[#allocation14 + $0x8] sm:$0xff] %vm144, %v1429
    // Predicated region
    $region78: #{tpu_custom_call.1} parent=1 // pred_check
      _
    $region79: #{tpu_custom_call.1} parent=1 // pred_check_branch
      %1433 = sbr.rel (0) target = $region81
    $region80: #{tpu_custom_call.1} parent=1 // pred_region
      %s1435 = ssub.s32 256, 256
      %1436 = vsyncadd [#allocation5], %s1435
      %s1437 = sshll.u32 [#allocation14], 4
      %s1438 = int_to_ptr.vmem [resolvable:$true] %s1437
      %1443 = dma.vmem_to_hbm [thread:$0]  %s1438, 256, %s13, [#allocation5], 128, 128, 8
    $region81: #{tpu_custom_call.1} parent=1 // pred_fallthru
      _
    // Predicated region
    $region82: #{tpu_custom_call.1} parent=1 // pred_check
      _
    $region83: #{tpu_custom_call.1} parent=1 // pred_check_branch
      %1445 = sbr.rel (0) target = $region85
    $region84: #{tpu_custom_call.1} parent=1 // pred_region
      %1446 = dma.done [#allocation5], 256
    $region85: #{tpu_custom_call.1} parent=1 // pred_fallthru
      _
    %1447 = vsyncpa [#allocation4], 1
    %1448 = vsyncpa [#allocation7], 1
    %1449 = vsyncpa [#allocation10], 1
    %1450 = vsyncpa [#allocation13], 1
    %1451 = vsyncpa [#allocation5], 1

</llo_original>
